<compile_context>
chip_gen: v7x
topology: tpu7x:2x2x1
jax: 0.10.0
libtpu: 0.0.40
codegen_flags: <defaults>
</compile_context>

<pallas_src>
import functools

import jax
import jax.numpy as jnp
from jax import lax
from jax.experimental import pallas as pl
from jax.experimental.pallas import tpu as pltpu

KERNEL_SIZE = 7
PAD = KERNEL_SIZE // 2
_NTAPS = KERNEL_SIZE * KERNEL_SIZE

_SUBLANE = 8
_LANE = 128


def _round_up(x, m):
    return (x + m - 1) // m * m


def _pick_c_tile(C, H, W, budget_bytes=2 * 1024 * 1024):
    """Largest divisor of C whose (8,128)-padded VMEM footprint fits the budget."""
    per_c = _round_up(H, _SUBLANE) * _round_up(W, _LANE) * 4
    max_tile = max(1, budget_bytes // per_c)
    t = int(min(C, max_tile))
    while C % t != 0:
        t -= 1
    return t


def _spatial_attention_kernel(x_ref, w_ref, o_ref, sum_sc, max_sc, feat_sc,
                              *, H, W, Hr, Wr):
    # x_ref:   (1, C_TILE, H, W) VMEM block for (batch n, channel-tile c)
    # w_ref:   (2*49,)           SMEM scalar taps, layout [in_c, ki, kj]
    #                            (avg-channel taps already scaled by 1/C)
    # o_ref:   (1, 1, H, W)      VMEM output block, resident across the c axis
    # sum_sc:  (H, W)  f32       running channel-sum
    # max_sc:  (H, W)  f32       running channel-max
    # feat_sc: (2, Hr, Wr) f32   zero-padded [sum, max] map for the conv
    c = pl.program_id(1)
    nc = pl.num_programs(1)

    x = x_ref[0].astype(jnp.float32)          # (C_TILE, H, W), f32 in-register
    part_sum = jnp.sum(x, axis=0)             # (H, W)
    part_max = jnp.max(x, axis=0)             # (H, W)

    @pl.when(c == 0)
    def _init():
        sum_sc[...] = part_sum
        max_sc[...] = part_max

    @pl.when(c > 0)
    def _accum():
        sum_sc[...] = sum_sc[...] + part_sum
        max_sc[...] = jnp.maximum(max_sc[...], part_max)

    @pl.when(c == nc - 1)
    def _finalize():
        # Zero-padded feature map: the feature sits at [0:H, 0:W]; rows
        # [H:Hr) and lanes [W:Wr) are zero.  Since Hr >= H + PAD and
        # Wr >= W + PAD, every roll below wraps only zeros into the output
        # window [0:H, 0:W] -> exact Conv2d(padding=3) semantics with no
        # per-tap boundary mask.
        feat_sc[...] = jnp.zeros_like(feat_sc)
        feat_sc[0, pl.ds(0, H), pl.ds(0, W)] = sum_sc[...]
        feat_sc[1, pl.ds(0, H), pl.ds(0, W)] = max_sc[...]
        feat = feat_sc[...]                   # (2, Hr, Wr)

        acc = jnp.zeros((Hr, Wr), jnp.float32)
        for ki in range(KERNEL_SIZE):
            sh_r = (PAD - ki) % Hr            # sublane roll, hoisted out of kj
            rowf = pltpu.roll(feat, shift=sh_r, axis=1) if sh_r else feat
            for kj in range(KERNEL_SIZE):
                sh_c = (PAD - kj) % Wr        # lane roll only in the inner loop
                tap = pltpu.roll(rowf, shift=sh_c, axis=2) if sh_c else rowf
                w_avg = w_ref[ki * KERNEL_SIZE + kj]
                w_max = w_ref[_NTAPS + ki * KERNEL_SIZE + kj]
                acc = acc + w_avg * tap[0] + w_max * tap[1]

        o_ref[...] = jax.nn.sigmoid(acc[:H, :W])[None, None, :, :]


@jax.jit
def spatial_attention(x, w):
    """x: (N, C, H, W), w: (1, 2, 7, 7) -> (N, 1, H, W) float32."""
    N, C, H, W = x.shape
    Hr = _round_up(H + PAD, _SUBLANE)
    Wr = _round_up(W + PAD, _LANE)
    c_tile = _pick_c_tile(C, H, W)
    n_c = C // c_tile

    # Fold the 1/C of the channel mean into the avg-channel conv taps.
    w = w.astype(jnp.float32)
    w = w.at[:, 0].multiply(1.0 / C)
    w_flat = w.reshape(-1)                    # (2*49,), layout [in_c, ki, kj]

    # Explicit VMEM budget (double-buffered input block + scratch + headroom),
    # capped well under v7x's 64 MiB physical VMEM.
    hw_pad_bytes = _round_up(H, _SUBLANE) * _round_up(W, _LANE) * 4
    block_bytes = c_tile * hw_pad_bytes
    scratch_bytes = 2 * hw_pad_bytes + 2 * Hr * Wr * 4
    vmem_limit = int(min(48 * 1024 * 1024,
                         max(16 * 1024 * 1024,
                             4 * block_bytes + scratch_bytes + (4 << 20))))

    kernel = functools.partial(_spatial_attention_kernel,
                               H=H, W=W, Hr=Hr, Wr=Wr)
    return pl.pallas_call(
        kernel,
        out_shape=jax.ShapeDtypeStruct((N, 1, H, W), jnp.float32),
        grid_spec=pltpu.PrefetchScalarGridSpec(
            num_scalar_prefetch=0,
            grid=(N, n_c),
            in_specs=[
                pl.BlockSpec((1, c_tile, H, W), lambda n, c: (n, c, 0, 0)),
                pl.BlockSpec(memory_space=pltpu.MemorySpace.SMEM),
            ],
            out_specs=pl.BlockSpec((1, 1, H, W), lambda n, c: (n, 0, 0, 0)),
            scratch_shapes=[
                pltpu.VMEM((H, W), jnp.float32),       # running channel-sum
                pltpu.VMEM((H, W), jnp.float32),       # running channel-max
                pltpu.VMEM((2, Hr, Wr), jnp.float32),  # zero-padded conv input
            ],
        ),
        compiler_params=pltpu.CompilerParams(
            dimension_semantics=("parallel", "arbitrary"),
            vmem_limit_bytes=vmem_limit),
    )(x, w_flat)


def _reference(x, w):
    """Pure-JAX reference matching the PyTorch forward exactly."""
    x = x.astype(jnp.float32)
    avg = jnp.mean(x, axis=1, keepdims=True)
    mx = jnp.max(x, axis=1, keepdims=True)
    feat = jnp.concatenate([avg, mx], axis=1)             # (N, 2, H, W)
    y = lax.conv_general_dilated(
        feat, w.astype(jnp.float32), window_strides=(1, 1),
        padding=((PAD, PAD), (PAD, PAD)),
        dimension_numbers=("NCHW", "OIHW", "NCHW"))
    return jax.nn.sigmoid(y)


if __name__ == "__main__":
    key = jax.random.PRNGKey(0)
    kx, kw = jax.random.split(key)

    # Small shapes consistent with the module: N=2, C=4, H=W=16.
    x = jax.random.normal(kx, (2, 4, 16, 16), dtype=jnp.float32)

    # Deterministic conv weight, Conv2d(2, 1, 7, bias=False) -> (1, 2, 7, 7),
    # kaiming-uniform-style bound = 1/sqrt(fan_in).
    fan_in = 2 * KERNEL_SIZE * KERNEL_SIZE
    bound = 1.0 / jnp.sqrt(jnp.float32(fan_in))
    w = jax.random.uniform(kw, (1, 2, KERNEL_SIZE, KERNEL_SIZE),
                           dtype=jnp.float32, minval=-bound, maxval=bound)

    out = spatial_attention(x, w)
    out = jax.block_until_ready(out)

    ref = _reference(x, w)
    assert out.shape == (2, 1, 16, 16)
    assert jnp.allclose(out, ref, atol=1e-5, rtol=1e-5), (
        float(jnp.max(jnp.abs(out - ref))))

    print("KERNEL_OK")
</pallas_src>

<mosaic_0001>
module attributes {stable_mosaic.version = 11 : i64} {
  func.func @_spatial_attention_kernel(%arg0: i32, %arg1: i32, %arg2: memref<1x4x16x16xf32, #tpu.memory_space<vmem>>, %arg3: memref<98xf32, #tpu.memory_space<smem>>, %arg4: memref<1x1x16x16xf32, #tpu.memory_space<vmem>>, %arg5: memref<16x16xf32, #tpu.memory_space<vmem>>, %arg6: memref<16x16xf32, #tpu.memory_space<vmem>>, %arg7: memref<2x24x128xf32, #tpu.memory_space<vmem>>) attributes {dimension_semantics = [#tpu.dimension_semantics<parallel>, #tpu.dimension_semantics<arbitrary>], iteration_bounds = array<i64: 2, 1>, scalar_prefetch = 0 : i64, scratch_operands = 3 : i64, tpu.core_type = #tpu.core_type<tc>, window_params = [{transform_indices = @transform_0, window_bounds = array<i64: 1, 4, 16, 16>}, {transform_indices = @transform_1, window_bounds = array<i64: 98>}, {transform_indices = @transform_2, window_bounds = array<i64: 1, 1, 16, 16>}]} {
    %c0 = arith.constant 0 : index
    %c0_0 = arith.constant 0 : index
    %c0_1 = arith.constant 0 : index
    %c0_2 = arith.constant 0 : index
    %0 = vector.load %arg2[%c0, %c0_0, %c0_1, %c0_2] : memref<1x4x16x16xf32, #tpu.memory_space<vmem>>, vector<1x4x16x16xf32>
    %1 = vector.shape_cast %0 : vector<1x4x16x16xf32> to vector<4x16x16xf32>
    %cst = arith.constant dense<0.000000e+00> : vector<16x16xf32>
    %2 = vector.multi_reduction <add>, %1, %cst [0] : vector<4x16x16xf32> to vector<16x16xf32>
    %cst_3 = arith.constant dense<0xFF800000> : vector<16x16xf32>
    %3 = vector.multi_reduction <maximumf>, %1, %cst_3 [0] : vector<4x16x16xf32> to vector<16x16xf32>
    %c0_i32 = arith.constant 0 : i32
    %4 = arith.cmpi eq, %arg1, %c0_i32 : i32
    %5 = arith.extui %4 : i1 to i32
    %c0_i32_4 = arith.constant 0 : i32
    %6 = arith.cmpi ne, %5, %c0_i32_4 : i32
    scf.if %6 {
      %c0_9 = arith.constant 0 : index
      %c0_10 = arith.constant 0 : index
      %13 = vector.load %arg5[%c0_9, %c0_10] : memref<16x16xf32, #tpu.memory_space<vmem>>, vector<16x16xf32>
      tpu.vector_store %arg5[%c0_9, %c0_10], %2 {strides = array<i32>} : memref<16x16xf32, #tpu.memory_space<vmem>>, vector<16x16xf32>,
      %c0_11 = arith.constant 0 : index
      %c0_12 = arith.constant 0 : index
      %14 = vector.load %arg6[%c0_11, %c0_12] : memref<16x16xf32, #tpu.memory_space<vmem>>, vector<16x16xf32>
      tpu.vector_store %arg6[%c0_11, %c0_12], %3 {strides = array<i32>} : memref<16x16xf32, #tpu.memory_space<vmem>>, vector<16x16xf32>,
    } else {
    }
    %c0_i32_5 = arith.constant 0 : i32
    %7 = arith.cmpi sgt, %arg1, %c0_i32_5 : i32
    %8 = arith.extui %7 : i1 to i32
    %c0_i32_6 = arith.constant 0 : i32
    %9 = arith.cmpi ne, %8, %c0_i32_6 : i32
    scf.if %9 {
      %c0_9 = arith.constant 0 : index
      %c0_10 = arith.constant 0 : index
      %13 = vector.load %arg5[%c0_9, %c0_10] : memref<16x16xf32, #tpu.memory_space<vmem>>, vector<16x16xf32>
      %14 = arith.addf %13, %2 : vector<16x16xf32>
      %c0_11 = arith.constant 0 : index
      %c0_12 = arith.constant 0 : index
      %15 = vector.load %arg5[%c0_11, %c0_12] : memref<16x16xf32, #tpu.memory_space<vmem>>, vector<16x16xf32>
      tpu.vector_store %arg5[%c0_11, %c0_12], %14 {strides = array<i32>} : memref<16x16xf32, #tpu.memory_space<vmem>>, vector<16x16xf32>,
      %c0_13 = arith.constant 0 : index
      %c0_14 = arith.constant 0 : index
      %16 = vector.load %arg6[%c0_13, %c0_14] : memref<16x16xf32, #tpu.memory_space<vmem>>, vector<16x16xf32>
      %17 = arith.maximumf %16, %3 : vector<16x16xf32>
      %c0_15 = arith.constant 0 : index
      %c0_16 = arith.constant 0 : index
      %18 = vector.load %arg6[%c0_15, %c0_16] : memref<16x16xf32, #tpu.memory_space<vmem>>, vector<16x16xf32>
      tpu.vector_store %arg6[%c0_15, %c0_16], %17 {strides = array<i32>} : memref<16x16xf32, #tpu.memory_space<vmem>>, vector<16x16xf32>,
    } else {
    }
    %c0_i32_7 = arith.constant 0 : i32
    %10 = arith.cmpi eq, %arg1, %c0_i32_7 : i32
    %11 = arith.extui %10 : i1 to i32
    %c0_i32_8 = arith.constant 0 : i32
    %12 = arith.cmpi ne, %11, %c0_i32_8 : i32
    scf.if %12 {
      %cst_9 = arith.constant 0.000000e+00 : f32
      %13 = vector.broadcast %cst_9 : f32 to vector<2x24x128xf32>
      %c0_10 = arith.constant 0 : index
      %c0_11 = arith.constant 0 : index
      %c0_12 = arith.constant 0 : index
      %14 = vector.load %arg7[%c0_10, %c0_11, %c0_12] : memref<2x24x128xf32, #tpu.memory_space<vmem>>, vector<2x24x128xf32>
      tpu.vector_store %arg7[%c0_10, %c0_11, %c0_12], %13 {strides = array<i32>} : memref<2x24x128xf32, #tpu.memory_space<vmem>>, vector<2x24x128xf32>,
      %c0_13 = arith.constant 0 : index
      %c0_14 = arith.constant 0 : index
      %15 = vector.load %arg5[%c0_13, %c0_14] : memref<16x16xf32, #tpu.memory_space<vmem>>, vector<16x16xf32>
      %c0_15 = arith.constant 0 : index
      %c0_16 = arith.constant 0 : index
      %c0_17 = arith.constant 0 : index
      %16 = vector.load %arg7[%c0_15, %c0_16, %c0_17] : memref<2x24x128xf32, #tpu.memory_space<vmem>>, vector<1x16x16xf32>
      %17 = vector.shape_cast %16 : vector<1x16x16xf32> to vector<16x16xf32>
      %18 = vector.shape_cast %15 : vector<16x16xf32> to vector<1x16x16xf32>
      tpu.vector_store %arg7[%c0_15, %c0_16, %c0_17], %18 {strides = array<i32>} : memref<2x24x128xf32, #tpu.memory_space<vmem>>, vector<1x16x16xf32>,
      %c0_18 = arith.constant 0 : index
      %c0_19 = arith.constant 0 : index
      %19 = vector.load %arg6[%c0_18, %c0_19] : memref<16x16xf32, #tpu.memory_space<vmem>>, vector<16x16xf32>
      %c1 = arith.constant 1 : index
      %c0_20 = arith.constant 0 : index
      %c0_21 = arith.constant 0 : index
      %20 = vector.load %arg7[%c1, %c0_20, %c0_21] : memref<2x24x128xf32, #tpu.memory_space<vmem>>, vector<1x16x16xf32>
      %21 = vector.shape_cast %20 : vector<1x16x16xf32> to vector<16x16xf32>
      %22 = vector.shape_cast %19 : vector<16x16xf32> to vector<1x16x16xf32>
      tpu.vector_store %arg7[%c1, %c0_20, %c0_21], %22 {strides = array<i32>} : memref<2x24x128xf32, #tpu.memory_space<vmem>>, vector<1x16x16xf32>,
      %c0_22 = arith.constant 0 : index
      %c0_23 = arith.constant 0 : index
      %c0_24 = arith.constant 0 : index
      %23 = vector.load %arg7[%c0_22, %c0_23, %c0_24] : memref<2x24x128xf32, #tpu.memory_space<vmem>>, vector<2x24x128xf32>
      %cst_25 = arith.constant 0.000000e+00 : f32
      %24 = vector.broadcast %cst_25 : f32 to vector<24x128xf32>
      %c3_i32 = arith.constant 3 : i32
      %25 = tpu.dynamic_rotate %23 by %c3_i32 dim 1 : vector<2x24x128xf32>, i32 -> vector<2x24x128xf32>
      %c3_i32_26 = arith.constant 3 : i32
      %26 = tpu.dynamic_rotate %25 by %c3_i32_26 dim 2 : vector<2x24x128xf32>, i32 -> vector<2x24x128xf32>
      %c0_27 = arith.constant 0 : index
      %27 = memref.load %arg3[%c0_27] : memref<98xf32, #tpu.memory_space<smem>>
      %c49 = arith.constant 49 : index
      %28 = memref.load %arg3[%c49] : memref<98xf32, #tpu.memory_space<smem>>
      %29 = vector.extract_strided_slice %26 {offsets = [0, 0, 0], sizes = [1, 24, 128], strides = [1, 1, 1]} : vector<2x24x128xf32> to vector<1x24x128xf32>
      %30 = vector.shape_cast %29 : vector<1x24x128xf32> to vector<24x128xf32>
      %31 = vector.broadcast %27 : f32 to vector<24x128xf32>
      %32 = arith.mulf %31, %30 : vector<24x128xf32>
      %33 = arith.addf %24, %32 : vector<24x128xf32>
      %34 = vector.extract_strided_slice %26 {offsets = [1, 0, 0], sizes = [1, 24, 128], strides = [1, 1, 1]} : vector<2x24x128xf32> to vector<1x24x128xf32>
      %35 = vector.shape_cast %34 : vector<1x24x128xf32> to vector<24x128xf32>
      %36 = vector.broadcast %28 : f32 to vector<24x128xf32>
      %37 = arith.mulf %36, %35 : vector<24x128xf32>
      %38 = arith.addf %33, %37 : vector<24x128xf32>
      %c2_i32 = arith.constant 2 : i32
      %39 = tpu.dynamic_rotate %25 by %c2_i32 dim 2 : vector<2x24x128xf32>, i32 -> vector<2x24x128xf32>
      %c1_28 = arith.constant 1 : index
      %40 = memref.load %arg3[%c1_28] : memref<98xf32, #tpu.memory_space<smem>>
      %c50 = arith.constant 50 : index
      %41 = memref.load %arg3[%c50] : memref<98xf32, #tpu.memory_space<smem>>
      %42 = vector.extract_strided_slice %39 {offsets = [0, 0, 0], sizes = [1, 24, 128], strides = [1, 1, 1]} : vector<2x24x128xf32> to vector<1x24x128xf32>
      %43 = vector.shape_cast %42 : vector<1x24x128xf32> to vector<24x128xf32>
      %44 = vector.broadcast %40 : f32 to vector<24x128xf32>
      %45 = arith.mulf %44, %43 : vector<24x128xf32>
      %46 = arith.addf %38, %45 : vector<24x128xf32>
      %47 = vector.extract_strided_slice %39 {offsets = [1, 0, 0], sizes = [1, 24, 128], strides = [1, 1, 1]} : vector<2x24x128xf32> to vector<1x24x128xf32>
      %48 = vector.shape_cast %47 : vector<1x24x128xf32> to vector<24x128xf32>
      %49 = vector.broadcast %41 : f32 to vector<24x128xf32>
      %50 = arith.mulf %49, %48 : vector<24x128xf32>
      %51 = arith.addf %46, %50 : vector<24x128xf32>
      %c1_i32 = arith.constant 1 : i32
      %52 = tpu.dynamic_rotate %25 by %c1_i32 dim 2 : vector<2x24x128xf32>, i32 -> vector<2x24x128xf32>
      %c2 = arith.constant 2 : index
      %53 = memref.load %arg3[%c2] : memref<98xf32, #tpu.memory_space<smem>>
      %c51 = arith.constant 51 : index
      %54 = memref.load %arg3[%c51] : memref<98xf32, #tpu.memory_space<smem>>
      %55 = vector.extract_strided_slice %52 {offsets = [0, 0, 0], sizes = [1, 24, 128], strides = [1, 1, 1]} : vector<2x24x128xf32> to vector<1x24x128xf32>
      %56 = vector.shape_cast %55 : vector<1x24x128xf32> to vector<24x128xf32>
      %57 = vector.broadcast %53 : f32 to vector<24x128xf32>
      %58 = arith.mulf %57, %56 : vector<24x128xf32>
      %59 = arith.addf %51, %58 : vector<24x128xf32>
      %60 = vector.extract_strided_slice %52 {offsets = [1, 0, 0], sizes = [1, 24, 128], strides = [1, 1, 1]} : vector<2x24x128xf32> to vector<1x24x128xf32>
      %61 = vector.shape_cast %60 : vector<1x24x128xf32> to vector<24x128xf32>
      %62 = vector.broadcast %54 : f32 to vector<24x128xf32>
      %63 = arith.mulf %62, %61 : vector<24x128xf32>
      %64 = arith.addf %59, %63 : vector<24x128xf32>
      %c3 = arith.constant 3 : index
      %65 = memref.load %arg3[%c3] : memref<98xf32, #tpu.memory_space<smem>>
      %c52 = arith.constant 52 : index
      %66 = memref.load %arg3[%c52] : memref<98xf32, #tpu.memory_space<smem>>
      %67 = vector.extract_strided_slice %25 {offsets = [0, 0, 0], sizes = [1, 24, 128], strides = [1, 1, 1]} : vector<2x24x128xf32> to vector<1x24x128xf32>
      %68 = vector.shape_cast %67 : vector<1x24x128xf32> to vector<24x128xf32>
      %69 = vector.broadcast %65 : f32 to vector<24x128xf32>
      %70 = arith.mulf %69, %68 : vector<24x128xf32>
      %71 = arith.addf %64, %70 : vector<24x128xf32>
      %72 = vector.extract_strided_slice %25 {offsets = [1, 0, 0], sizes = [1, 24, 128], strides = [1, 1, 1]} : vector<2x24x128xf32> to vector<1x24x128xf32>
      %73 = vector.shape_cast %72 : vector<1x24x128xf32> to vector<24x128xf32>
      %74 = vector.broadcast %66 : f32 to vector<24x128xf32>
      %75 = arith.mulf %74, %73 : vector<24x128xf32>
      %76 = arith.addf %71, %75 : vector<24x128xf32>
      %c127_i32 = arith.constant 127 : i32
      %77 = tpu.dynamic_rotate %25 by %c127_i32 dim 2 : vector<2x24x128xf32>, i32 -> vector<2x24x128xf32>
      %c4 = arith.constant 4 : index
      %78 = memref.load %arg3[%c4] : memref<98xf32, #tpu.memory_space<smem>>
      %c53 = arith.constant 53 : index
      %79 = memref.load %arg3[%c53] : memref<98xf32, #tpu.memory_space<smem>>
      %80 = vector.extract_strided_slice %77 {offsets = [0, 0, 0], sizes = [1, 24, 128], strides = [1, 1, 1]} : vector<2x24x128xf32> to vector<1x24x128xf32>
      %81 = vector.shape_cast %80 : vector<1x24x128xf32> to vector<24x128xf32>
      %82 = vector.broadcast %78 : f32 to vector<24x128xf32>
      %83 = arith.mulf %82, %81 : vector<24x128xf32>
      %84 = arith.addf %76, %83 : vector<24x128xf32>
      %85 = vector.extract_strided_slice %77 {offsets = [1, 0, 0], sizes = [1, 24, 128], strides = [1, 1, 1]} : vector<2x24x128xf32> to vector<1x24x128xf32>
      %86 = vector.shape_cast %85 : vector<1x24x128xf32> to vector<24x128xf32>
      %87 = vector.broadcast %79 : f32 to vector<24x128xf32>
      %88 = arith.mulf %87, %86 : vector<24x128xf32>
      %89 = arith.addf %84, %88 : vector<24x128xf32>
      %c126_i32 = arith.constant 126 : i32
      %90 = tpu.dynamic_rotate %25 by %c126_i32 dim 2 : vector<2x24x128xf32>, i32 -> vector<2x24x128xf32>
      %c5 = arith.constant 5 : index
      %91 = memref.load %arg3[%c5] : memref<98xf32, #tpu.memory_space<smem>>
      %c54 = arith.constant 54 : index
      %92 = memref.load %arg3[%c54] : memref<98xf32, #tpu.memory_space<smem>>
      %93 = vector.extract_strided_slice %90 {offsets = [0, 0, 0], sizes = [1, 24, 128], strides = [1, 1, 1]} : vector<2x24x128xf32> to vector<1x24x128xf32>
      %94 = vector.shape_cast %93 : vector<1x24x128xf32> to vector<24x128xf32>
      %95 = vector.broadcast %91 : f32 to vector<24x128xf32>
      %96 = arith.mulf %95, %94 : vector<24x128xf32>
      %97 = arith.addf %89, %96 : vector<24x128xf32>
      %98 = vector.extract_strided_slice %90 {offsets = [1, 0, 0], sizes = [1, 24, 128], strides = [1, 1, 1]} : vector<2x24x128xf32> to vector<1x24x128xf32>
      %99 = vector.shape_cast %98 : vector<1x24x128xf32> to vector<24x128xf32>
      %100 = vector.broadcast %92 : f32 to vector<24x128xf32>
      %101 = arith.mulf %100, %99 : vector<24x128xf32>
      %102 = arith.addf %97, %101 : vector<24x128xf32>
      %c125_i32 = arith.constant 125 : i32
      %103 = tpu.dynamic_rotate %25 by %c125_i32 dim 2 : vector<2x24x128xf32>, i32 -> vector<2x24x128xf32>
      %c6 = arith.constant 6 : index
      %104 = memref.load %arg3[%c6] : memref<98xf32, #tpu.memory_space<smem>>
      %c55 = arith.constant 55 : index
      %105 = memref.load %arg3[%c55] : memref<98xf32, #tpu.memory_space<smem>>
      %106 = vector.extract_strided_slice %103 {offsets = [0, 0, 0], sizes = [1, 24, 128], strides = [1, 1, 1]} : vector<2x24x128xf32> to vector<1x24x128xf32>
      %107 = vector.shape_cast %106 : vector<1x24x128xf32> to vector<24x128xf32>
      %108 = vector.broadcast %104 : f32 to vector<24x128xf32>
      %109 = arith.mulf %108, %107 : vector<24x128xf32>
      %110 = arith.addf %102, %109 : vector<24x128xf32>
      %111 = vector.extract_strided_slice %103 {offsets = [1, 0, 0], sizes = [1, 24, 128], strides = [1, 1, 1]} : vector<2x24x128xf32> to vector<1x24x128xf32>
      %112 = vector.shape_cast %111 : vector<1x24x128xf32> to vector<24x128xf32>
      %113 = vector.broadcast %105 : f32 to vector<24x128xf32>
      %114 = arith.mulf %113, %112 : vector<24x128xf32>
      %115 = arith.addf %110, %114 : vector<24x128xf32>
      %c2_i32_29 = arith.constant 2 : i32
      %116 = tpu.dynamic_rotate %23 by %c2_i32_29 dim 1 : vector<2x24x128xf32>, i32 -> vector<2x24x128xf32>
      %c3_i32_30 = arith.constant 3 : i32
      %117 = tpu.dynamic_rotate %116 by %c3_i32_30 dim 2 : vector<2x24x128xf32>, i32 -> vector<2x24x128xf32>
      %c7 = arith.constant 7 : index
      %118 = memref.load %arg3[%c7] : memref<98xf32, #tpu.memory_space<smem>>
      %c56 = arith.constant 56 : index
      %119 = memref.load %arg3[%c56] : memref<98xf32, #tpu.memory_space<smem>>
      %120 = vector.extract_strided_slice %117 {offsets = [0, 0, 0], sizes = [1, 24, 128], strides = [1, 1, 1]} : vector<2x24x128xf32> to vector<1x24x128xf32>
      %121 = vector.shape_cast %120 : vector<1x24x128xf32> to vector<24x128xf32>
      %122 = vector.broadcast %118 : f32 to vector<24x128xf32>
      %123 = arith.mulf %122, %121 : vector<24x128xf32>
      %124 = arith.addf %115, %123 : vector<24x128xf32>
      %125 = vector.extract_strided_slice %117 {offsets = [1, 0, 0], sizes = [1, 24, 128], strides = [1, 1, 1]} : vector<2x24x128xf32> to vector<1x24x128xf32>
      %126 = vector.shape_cast %125 : vector<1x24x128xf32> to vector<24x128xf32>
      %127 = vector.broadcast %119 : f32 to vector<24x128xf32>
      %128 = arith.mulf %127, %126 : vector<24x128xf32>
      %129 = arith.addf %124, %128 : vector<24x128xf32>
      %c2_i32_31 = arith.constant 2 : i32
      %130 = tpu.dynamic_rotate %116 by %c2_i32_31 dim 2 : vector<2x24x128xf32>, i32 -> vector<2x24x128xf32>
      %c8 = arith.constant 8 : index
      %131 = memref.load %arg3[%c8] : memref<98xf32, #tpu.memory_space<smem>>
      %c57 = arith.constant 57 : index
      %132 = memref.load %arg3[%c57] : memref<98xf32, #tpu.memory_space<smem>>
      %133 = vector.extract_strided_slice %130 {offsets = [0, 0, 0], sizes = [1, 24, 128], strides = [1, 1, 1]} : vector<2x24x128xf32> to vector<1x24x128xf32>
      %134 = vector.shape_cast %133 : vector<1x24x128xf32> to vector<24x128xf32>
      %135 = vector.broadcast %131 : f32 to vector<24x128xf32>
      %136 = arith.mulf %135, %134 : vector<24x128xf32>
      %137 = arith.addf %129, %136 : vector<24x128xf32>
      %138 = vector.extract_strided_slice %130 {offsets = [1, 0, 0], sizes = [1, 24, 128], strides = [1, 1, 1]} : vector<2x24x128xf32> to vector<1x24x128xf32>
      %139 = vector.shape_cast %138 : vector<1x24x128xf32> to vector<24x128xf32>
      %140 = vector.broadcast %132 : f32 to vector<24x128xf32>
      %141 = arith.mulf %140, %139 : vector<24x128xf32>
      %142 = arith.addf %137, %141 : vector<24x128xf32>
      %c1_i32_32 = arith.constant 1 : i32
      %143 = tpu.dynamic_rotate %116 by %c1_i32_32 dim 2 : vector<2x24x128xf32>, i32 -> vector<2x24x128xf32>
      %c9 = arith.constant 9 : index
      %144 = memref.load %arg3[%c9] : memref<98xf32, #tpu.memory_space<smem>>
      %c58 = arith.constant 58 : index
      %145 = memref.load %arg3[%c58] : memref<98xf32, #tpu.memory_space<smem>>
      %146 = vector.extract_strided_slice %143 {offsets = [0, 0, 0], sizes = [1, 24, 128], strides = [1, 1, 1]} : vector<2x24x128xf32> to vector<1x24x128xf32>
      %147 = vector.shape_cast %146 : vector<1x24x128xf32> to vector<24x128xf32>
      %148 = vector.broadcast %144 : f32 to vector<24x128xf32>
      %149 = arith.mulf %148, %147 : vector<24x128xf32>
      %150 = arith.addf %142, %149 : vector<24x128xf32>
      %151 = vector.extract_strided_slice %143 {offsets = [1, 0, 0], sizes = [1, 24, 128], strides = [1, 1, 1]} : vector<2x24x128xf32> to vector<1x24x128xf32>
      %152 = vector.shape_cast %151 : vector<1x24x128xf32> to vector<24x128xf32>
      %153 = vector.broadcast %145 : f32 to vector<24x128xf32>
      %154 = arith.mulf %153, %152 : vector<24x128xf32>
      %155 = arith.addf %150, %154 : vector<24x128xf32>
      %c10 = arith.constant 10 : index
      %156 = memref.load %arg3[%c10] : memref<98xf32, #tpu.memory_space<smem>>
      %c59 = arith.constant 59 : index
      %157 = memref.load %arg3[%c59] : memref<98xf32, #tpu.memory_space<smem>>
      %158 = vector.extract_strided_slice %116 {offsets = [0, 0, 0], sizes = [1, 24, 128], strides = [1, 1, 1]} : vector<2x24x128xf32> to vector<1x24x128xf32>
      %159 = vector.shape_cast %158 : vector<1x24x128xf32> to vector<24x128xf32>
      %160 = vector.broadcast %156 : f32 to vector<24x128xf32>
      %161 = arith.mulf %160, %159 : vector<24x128xf32>
      %162 = arith.addf %155, %161 : vector<24x128xf32>
      %163 = vector.extract_strided_slice %116 {offsets = [1, 0, 0], sizes = [1, 24, 128], strides = [1, 1, 1]} : vector<2x24x128xf32> to vector<1x24x128xf32>
      %164 = vector.shape_cast %163 : vector<1x24x128xf32> to vector<24x128xf32>
      %165 = vector.broadcast %157 : f32 to vector<24x128xf32>
      %166 = arith.mulf %165, %164 : vector<24x128xf32>
      %167 = arith.addf %162, %166 : vector<24x128xf32>
      %c127_i32_33 = arith.constant 127 : i32
      %168 = tpu.dynamic_rotate %116 by %c127_i32_33 dim 2 : vector<2x24x128xf32>, i32 -> vector<2x24x128xf32>
      %c11 = arith.constant 11 : index
      %169 = memref.load %arg3[%c11] : memref<98xf32, #tpu.memory_space<smem>>
      %c60 = arith.constant 60 : index
      %170 = memref.load %arg3[%c60] : memref<98xf32, #tpu.memory_space<smem>>
      %171 = vector.extract_strided_slice %168 {offsets = [0, 0, 0], sizes = [1, 24, 128], strides = [1, 1, 1]} : vector<2x24x128xf32> to vector<1x24x128xf32>
      %172 = vector.shape_cast %171 : vector<1x24x128xf32> to vector<24x128xf32>
      %173 = vector.broadcast %169 : f32 to vector<24x128xf32>
      %174 = arith.mulf %173, %172 : vector<24x128xf32>
      %175 = arith.addf %167, %174 : vector<24x128xf32>
      %176 = vector.extract_strided_slice %168 {offsets = [1, 0, 0], sizes = [1, 24, 128], strides = [1, 1, 1]} : vector<2x24x128xf32> to vector<1x24x128xf32>
      %177 = vector.shape_cast %176 : vector<1x24x128xf32> to vector<24x128xf32>
      %178 = vector.broadcast %170 : f32 to vector<24x128xf32>
      %179 = arith.mulf %178, %177 : vector<24x128xf32>
      %180 = arith.addf %175, %179 : vector<24x128xf32>
      %c126_i32_34 = arith.constant 126 : i32
      %181 = tpu.dynamic_rotate %116 by %c126_i32_34 dim 2 : vector<2x24x128xf32>, i32 -> vector<2x24x128xf32>
      %c12 = arith.constant 12 : index
      %182 = memref.load %arg3[%c12] : memref<98xf32, #tpu.memory_space<smem>>
      %c61 = arith.constant 61 : index
      %183 = memref.load %arg3[%c61] : memref<98xf32, #tpu.memory_space<smem>>
      %184 = vector.extract_strided_slice %181 {offsets = [0, 0, 0], sizes = [1, 24, 128], strides = [1, 1, 1]} : vector<2x24x128xf32> to vector<1x24x128xf32>
      %185 = vector.shape_cast %184 : vector<1x24x128xf32> to vector<24x128xf32>
      %186 = vector.broadcast %182 : f32 to vector<24x128xf32>
      %187 = arith.mulf %186, %185 : vector<24x128xf32>
      %188 = arith.addf %180, %187 : vector<24x128xf32>
      %189 = vector.extract_strided_slice %181 {offsets = [1, 0, 0], sizes = [1, 24, 128], strides = [1, 1, 1]} : vector<2x24x128xf32> to vector<1x24x128xf32>
      %190 = vector.shape_cast %189 : vector<1x24x128xf32> to vector<24x128xf32>
      %191 = vector.broadcast %183 : f32 to vector<24x128xf32>
      %192 = arith.mulf %191, %190 : vector<24x128xf32>
      %193 = arith.addf %188, %192 : vector<24x128xf32>
      %c125_i32_35 = arith.constant 125 : i32
      %194 = tpu.dynamic_rotate %116 by %c125_i32_35 dim 2 : vector<2x24x128xf32>, i32 -> vector<2x24x128xf32>
      %c13 = arith.constant 13 : index
      %195 = memref.load %arg3[%c13] : memref<98xf32, #tpu.memory_space<smem>>
      %c62 = arith.constant 62 : index
      %196 = memref.load %arg3[%c62] : memref<98xf32, #tpu.memory_space<smem>>
      %197 = vector.extract_strided_slice %194 {offsets = [0, 0, 0], sizes = [1, 24, 128], strides = [1, 1, 1]} : vector<2x24x128xf32> to vector<1x24x128xf32>
      %198 = vector.shape_cast %197 : vector<1x24x128xf32> to vector<24x128xf32>
      %199 = vector.broadcast %195 : f32 to vector<24x128xf32>
      %200 = arith.mulf %199, %198 : vector<24x128xf32>
      %201 = arith.addf %193, %200 : vector<24x128xf32>
      %202 = vector.extract_strided_slice %194 {offsets = [1, 0, 0], sizes = [1, 24, 128], strides = [1, 1, 1]} : vector<2x24x128xf32> to vector<1x24x128xf32>
      %203 = vector.shape_cast %202 : vector<1x24x128xf32> to vector<24x128xf32>
      %204 = vector.broadcast %196 : f32 to vector<24x128xf32>
      %205 = arith.mulf %204, %203 : vector<24x128xf32>
      %206 = arith.addf %201, %205 : vector<24x128xf32>
      %c1_i32_36 = arith.constant 1 : i32
      %207 = tpu.dynamic_rotate %23 by %c1_i32_36 dim 1 : vector<2x24x128xf32>, i32 -> vector<2x24x128xf32>
      %c3_i32_37 = arith.constant 3 : i32
      %208 = tpu.dynamic_rotate %207 by %c3_i32_37 dim 2 : vector<2x24x128xf32>, i32 -> vector<2x24x128xf32>
      %c14 = arith.constant 14 : index
      %209 = memref.load %arg3[%c14] : memref<98xf32, #tpu.memory_space<smem>>
      %c63 = arith.constant 63 : index
      %210 = memref.load %arg3[%c63] : memref<98xf32, #tpu.memory_space<smem>>
      %211 = vector.extract_strided_slice %208 {offsets = [0, 0, 0], sizes = [1, 24, 128], strides = [1, 1, 1]} : vector<2x24x128xf32> to vector<1x24x128xf32>
      %212 = vector.shape_cast %211 : vector<1x24x128xf32> to vector<24x128xf32>
      %213 = vector.broadcast %209 : f32 to vector<24x128xf32>
      %214 = arith.mulf %213, %212 : vector<24x128xf32>
      %215 = arith.addf %206, %214 : vector<24x128xf32>
      %216 = vector.extract_strided_slice %208 {offsets = [1, 0, 0], sizes = [1, 24, 128], strides = [1, 1, 1]} : vector<2x24x128xf32> to vector<1x24x128xf32>
      %217 = vector.shape_cast %216 : vector<1x24x128xf32> to vector<24x128xf32>
      %218 = vector.broadcast %210 : f32 to vector<24x128xf32>
      %219 = arith.mulf %218, %217 : vector<24x128xf32>
      %220 = arith.addf %215, %219 : vector<24x128xf32>
      %c2_i32_38 = arith.constant 2 : i32
      %221 = tpu.dynamic_rotate %207 by %c2_i32_38 dim 2 : vector<2x24x128xf32>, i32 -> vector<2x24x128xf32>
      %c15 = arith.constant 15 : index
      %222 = memref.load %arg3[%c15] : memref<98xf32, #tpu.memory_space<smem>>
      %c64 = arith.constant 64 : index
      %223 = memref.load %arg3[%c64] : memref<98xf32, #tpu.memory_space<smem>>
      %224 = vector.extract_strided_slice %221 {offsets = [0, 0, 0], sizes = [1, 24, 128], strides = [1, 1, 1]} : vector<2x24x128xf32> to vector<1x24x128xf32>
      %225 = vector.shape_cast %224 : vector<1x24x128xf32> to vector<24x128xf32>
      %226 = vector.broadcast %222 : f32 to vector<24x128xf32>
      %227 = arith.mulf %226, %225 : vector<24x128xf32>
      %228 = arith.addf %220, %227 : vector<24x128xf32>
      %229 = vector.extract_strided_slice %221 {offsets = [1, 0, 0], sizes = [1, 24, 128], strides = [1, 1, 1]} : vector<2x24x128xf32> to vector<1x24x128xf32>
      %230 = vector.shape_cast %229 : vector<1x24x128xf32> to vector<24x128xf32>
      %231 = vector.broadcast %223 : f32 to vector<24x128xf32>
      %232 = arith.mulf %231, %230 : vector<24x128xf32>
      %233 = arith.addf %228, %232 : vector<24x128xf32>
      %c1_i32_39 = arith.constant 1 : i32
      %234 = tpu.dynamic_rotate %207 by %c1_i32_39 dim 2 : vector<2x24x128xf32>, i32 -> vector<2x24x128xf32>
      %c16 = arith.constant 16 : index
      %235 = memref.load %arg3[%c16] : memref<98xf32, #tpu.memory_space<smem>>
      %c65 = arith.constant 65 : index
      %236 = memref.load %arg3[%c65] : memref<98xf32, #tpu.memory_space<smem>>
      %237 = vector.extract_strided_slice %234 {offsets = [0, 0, 0], sizes = [1, 24, 128], strides = [1, 1, 1]} : vector<2x24x128xf32> to vector<1x24x128xf32>
      %238 = vector.shape_cast %237 : vector<1x24x128xf32> to vector<24x128xf32>
      %239 = vector.broadcast %235 : f32 to vector<24x128xf32>
      %240 = arith.mulf %239, %238 : vector<24x128xf32>
      %241 = arith.addf %233, %240 : vector<24x128xf32>
      %242 = vector.extract_strided_slice %234 {offsets = [1, 0, 0], sizes = [1, 24, 128], strides = [1, 1, 1]} : vector<2x24x128xf32> to vector<1x24x128xf32>
      %243 = vector.shape_cast %242 : vector<1x24x128xf32> to vector<24x128xf32>
      %244 = vector.broadcast %236 : f32 to vector<24x128xf32>
      %245 = arith.mulf %244, %243 : vector<24x128xf32>
      %246 = arith.addf %241, %245 : vector<24x128xf32>
      %c17 = arith.constant 17 : index
      %247 = memref.load %arg3[%c17] : memref<98xf32, #tpu.memory_space<smem>>
      %c66 = arith.constant 66 : index
      %248 = memref.load %arg3[%c66] : memref<98xf32, #tpu.memory_space<smem>>
      %249 = vector.extract_strided_slice %207 {offsets = [0, 0, 0], sizes = [1, 24, 128], strides = [1, 1, 1]} : vector<2x24x128xf32> to vector<1x24x128xf32>
      %250 = vector.shape_cast %249 : vector<1x24x128xf32> to vector<24x128xf32>
      %251 = vector.broadcast %247 : f32 to vector<24x128xf32>
      %252 = arith.mulf %251, %250 : vector<24x128xf32>
      %253 = arith.addf %246, %252 : vector<24x128xf32>
      %254 = vector.extract_strided_slice %207 {offsets = [1, 0, 0], sizes = [1, 24, 128], strides = [1, 1, 1]} : vector<2x24x128xf32> to vector<1x24x128xf32>
      %255 = vector.shape_cast %254 : vector<1x24x128xf32> to vector<24x128xf32>
      %256 = vector.broadcast %248 : f32 to vector<24x128xf32>
      %257 = arith.mulf %256, %255 : vector<24x128xf32>
      %258 = arith.addf %253, %257 : vector<24x128xf32>
      %c127_i32_40 = arith.constant 127 : i32
      %259 = tpu.dynamic_rotate %207 by %c127_i32_40 dim 2 : vector<2x24x128xf32>, i32 -> vector<2x24x128xf32>
      %c18 = arith.constant 18 : index
      %260 = memref.load %arg3[%c18] : memref<98xf32, #tpu.memory_space<smem>>
      %c67 = arith.constant 67 : index
      %261 = memref.load %arg3[%c67] : memref<98xf32, #tpu.memory_space<smem>>
      %262 = vector.extract_strided_slice %259 {offsets = [0, 0, 0], sizes = [1, 24, 128], strides = [1, 1, 1]} : vector<2x24x128xf32> to vector<1x24x128xf32>
      %263 = vector.shape_cast %262 : vector<1x24x128xf32> to vector<24x128xf32>
      %264 = vector.broadcast %260 : f32 to vector<24x128xf32>
      %265 = arith.mulf %264, %263 : vector<24x128xf32>
      %266 = arith.addf %258, %265 : vector<24x128xf32>
      %267 = vector.extract_strided_slice %259 {offsets = [1, 0, 0], sizes = [1, 24, 128], strides = [1, 1, 1]} : vector<2x24x128xf32> to vector<1x24x128xf32>
      %268 = vector.shape_cast %267 : vector<1x24x128xf32> to vector<24x128xf32>
      %269 = vector.broadcast %261 : f32 to vector<24x128xf32>
      %270 = arith.mulf %269, %268 : vector<24x128xf32>
      %271 = arith.addf %266, %270 : vector<24x128xf32>
      %c126_i32_41 = arith.constant 126 : i32
      %272 = tpu.dynamic_rotate %207 by %c126_i32_41 dim 2 : vector<2x24x128xf32>, i32 -> vector<2x24x128xf32>
      %c19 = arith.constant 19 : index
      %273 = memref.load %arg3[%c19] : memref<98xf32, #tpu.memory_space<smem>>
      %c68 = arith.constant 68 : index
      %274 = memref.load %arg3[%c68] : memref<98xf32, #tpu.memory_space<smem>>
      %275 = vector.extract_strided_slice %272 {offsets = [0, 0, 0], sizes = [1, 24, 128], strides = [1, 1, 1]} : vector<2x24x128xf32> to vector<1x24x128xf32>
      %276 = vector.shape_cast %275 : vector<1x24x128xf32> to vector<24x128xf32>
      %277 = vector.broadcast %273 : f32 to vector<24x128xf32>
      %278 = arith.mulf %277, %276 : vector<24x128xf32>
      %279 = arith.addf %271, %278 : vector<24x128xf32>
      %280 = vector.extract_strided_slice %272 {offsets = [1, 0, 0], sizes = [1, 24, 128], strides = [1, 1, 1]} : vector<2x24x128xf32> to vector<1x24x128xf32>
      %281 = vector.shape_cast %280 : vector<1x24x128xf32> to vector<24x128xf32>
      %282 = vector.broadcast %274 : f32 to vector<24x128xf32>
      %283 = arith.mulf %282, %281 : vector<24x128xf32>
      %284 = arith.addf %279, %283 : vector<24x128xf32>
      %c125_i32_42 = arith.constant 125 : i32
      %285 = tpu.dynamic_rotate %207 by %c125_i32_42 dim 2 : vector<2x24x128xf32>, i32 -> vector<2x24x128xf32>
      %c20 = arith.constant 20 : index
      %286 = memref.load %arg3[%c20] : memref<98xf32, #tpu.memory_space<smem>>
      %c69 = arith.constant 69 : index
      %287 = memref.load %arg3[%c69] : memref<98xf32, #tpu.memory_space<smem>>
      %288 = vector.extract_strided_slice %285 {offsets = [0, 0, 0], sizes = [1, 24, 128], strides = [1, 1, 1]} : vector<2x24x128xf32> to vector<1x24x128xf32>
      %289 = vector.shape_cast %288 : vector<1x24x128xf32> to vector<24x128xf32>
      %290 = vector.broadcast %286 : f32 to vector<24x128xf32>
      %291 = arith.mulf %290, %289 : vector<24x128xf32>
      %292 = arith.addf %284, %291 : vector<24x128xf32>
      %293 = vector.extract_strided_slice %285 {offsets = [1, 0, 0], sizes = [1, 24, 128], strides = [1, 1, 1]} : vector<2x24x128xf32> to vector<1x24x128xf32>
      %294 = vector.shape_cast %293 : vector<1x24x128xf32> to vector<24x128xf32>
      %295 = vector.broadcast %287 : f32 to vector<24x128xf32>
      %296 = arith.mulf %295, %294 : vector<24x128xf32>
      %297 = arith.addf %292, %296 : vector<24x128xf32>
      %c3_i32_43 = arith.constant 3 : i32
      %298 = tpu.dynamic_rotate %23 by %c3_i32_43 dim 2 : vector<2x24x128xf32>, i32 -> vector<2x24x128xf32>
      %c21 = arith.constant 21 : index
      %299 = memref.load %arg3[%c21] : memref<98xf32, #tpu.memory_space<smem>>
      %c70 = arith.constant 70 : index
      %300 = memref.load %arg3[%c70] : memref<98xf32, #tpu.memory_space<smem>>
      %301 = vector.extract_strided_slice %298 {offsets = [0, 0, 0], sizes = [1, 24, 128], strides = [1, 1, 1]} : vector<2x24x128xf32> to vector<1x24x128xf32>
      %302 = vector.shape_cast %301 : vector<1x24x128xf32> to vector<24x128xf32>
      %303 = vector.broadcast %299 : f32 to vector<24x128xf32>
      %304 = arith.mulf %303, %302 : vector<24x128xf32>
      %305 = arith.addf %297, %304 : vector<24x128xf32>
      %306 = vector.extract_strided_slice %298 {offsets = [1, 0, 0], sizes = [1, 24, 128], strides = [1, 1, 1]} : vector<2x24x128xf32> to vector<1x24x128xf32>
      %307 = vector.shape_cast %306 : vector<1x24x128xf32> to vector<24x128xf32>
      %308 = vector.broadcast %300 : f32 to vector<24x128xf32>
      %309 = arith.mulf %308, %307 : vector<24x128xf32>
      %310 = arith.addf %305, %309 : vector<24x128xf32>
      %c2_i32_44 = arith.constant 2 : i32
      %311 = tpu.dynamic_rotate %23 by %c2_i32_44 dim 2 : vector<2x24x128xf32>, i32 -> vector<2x24x128xf32>
      %c22 = arith.constant 22 : index
      %312 = memref.load %arg3[%c22] : memref<98xf32, #tpu.memory_space<smem>>
      %c71 = arith.constant 71 : index
      %313 = memref.load %arg3[%c71] : memref<98xf32, #tpu.memory_space<smem>>
      %314 = vector.extract_strided_slice %311 {offsets = [0, 0, 0], sizes = [1, 24, 128], strides = [1, 1, 1]} : vector<2x24x128xf32> to vector<1x24x128xf32>
      %315 = vector.shape_cast %314 : vector<1x24x128xf32> to vector<24x128xf32>
      %316 = vector.broadcast %312 : f32 to vector<24x128xf32>
      %317 = arith.mulf %316, %315 : vector<24x128xf32>
      %318 = arith.addf %310, %317 : vector<24x128xf32>
      %319 = vector.extract_strided_slice %311 {offsets = [1, 0, 0], sizes = [1, 24, 128], strides = [1, 1, 1]} : vector<2x24x128xf32> to vector<1x24x128xf32>
      %320 = vector.shape_cast %319 : vector<1x24x128xf32> to vector<24x128xf32>
      %321 = vector.broadcast %313 : f32 to vector<24x128xf32>
      %322 = arith.mulf %321, %320 : vector<24x128xf32>
      %323 = arith.addf %318, %322 : vector<24x128xf32>
      %c1_i32_45 = arith.constant 1 : i32
      %324 = tpu.dynamic_rotate %23 by %c1_i32_45 dim 2 : vector<2x24x128xf32>, i32 -> vector<2x24x128xf32>
      %c23 = arith.constant 23 : index
      %325 = memref.load %arg3[%c23] : memref<98xf32, #tpu.memory_space<smem>>
      %c72 = arith.constant 72 : index
      %326 = memref.load %arg3[%c72] : memref<98xf32, #tpu.memory_space<smem>>
      %327 = vector.extract_strided_slice %324 {offsets = [0, 0, 0], sizes = [1, 24, 128], strides = [1, 1, 1]} : vector<2x24x128xf32> to vector<1x24x128xf32>
      %328 = vector.shape_cast %327 : vector<1x24x128xf32> to vector<24x128xf32>
      %329 = vector.broadcast %325 : f32 to vector<24x128xf32>
      %330 = arith.mulf %329, %328 : vector<24x128xf32>
      %331 = arith.addf %323, %330 : vector<24x128xf32>
      %332 = vector.extract_strided_slice %324 {offsets = [1, 0, 0], sizes = [1, 24, 128], strides = [1, 1, 1]} : vector<2x24x128xf32> to vector<1x24x128xf32>
      %333 = vector.shape_cast %332 : vector<1x24x128xf32> to vector<24x128xf32>
      %334 = vector.broadcast %326 : f32 to vector<24x128xf32>
      %335 = arith.mulf %334, %333 : vector<24x128xf32>
      %336 = arith.addf %331, %335 : vector<24x128xf32>
      %c24 = arith.constant 24 : index
      %337 = memref.load %arg3[%c24] : memref<98xf32, #tpu.memory_space<smem>>
      %c73 = arith.constant 73 : index
      %338 = memref.load %arg3[%c73] : memref<98xf32, #tpu.memory_space<smem>>
      %339 = vector.extract_strided_slice %23 {offsets = [0, 0, 0], sizes = [1, 24, 128], strides = [1, 1, 1]} : vector<2x24x128xf32> to vector<1x24x128xf32>
      %340 = vector.shape_cast %339 : vector<1x24x128xf32> to vector<24x128xf32>
      %341 = vector.broadcast %337 : f32 to vector<24x128xf32>
      %342 = arith.mulf %341, %340 : vector<24x128xf32>
      %343 = arith.addf %336, %342 : vector<24x128xf32>
      %344 = vector.extract_strided_slice %23 {offsets = [1, 0, 0], sizes = [1, 24, 128], strides = [1, 1, 1]} : vector<2x24x128xf32> to vector<1x24x128xf32>
      %345 = vector.shape_cast %344 : vector<1x24x128xf32> to vector<24x128xf32>
      %346 = vector.broadcast %338 : f32 to vector<24x128xf32>
      %347 = arith.mulf %346, %345 : vector<24x128xf32>
      %348 = arith.addf %343, %347 : vector<24x128xf32>
      %c127_i32_46 = arith.constant 127 : i32
      %349 = tpu.dynamic_rotate %23 by %c127_i32_46 dim 2 : vector<2x24x128xf32>, i32 -> vector<2x24x128xf32>
      %c25 = arith.constant 25 : index
      %350 = memref.load %arg3[%c25] : memref<98xf32, #tpu.memory_space<smem>>
      %c74 = arith.constant 74 : index
      %351 = memref.load %arg3[%c74] : memref<98xf32, #tpu.memory_space<smem>>
      %352 = vector.extract_strided_slice %349 {offsets = [0, 0, 0], sizes = [1, 24, 128], strides = [1, 1, 1]} : vector<2x24x128xf32> to vector<1x24x128xf32>
      %353 = vector.shape_cast %352 : vector<1x24x128xf32> to vector<24x128xf32>
      %354 = vector.broadcast %350 : f32 to vector<24x128xf32>
      %355 = arith.mulf %354, %353 : vector<24x128xf32>
      %356 = arith.addf %348, %355 : vector<24x128xf32>
      %357 = vector.extract_strided_slice %349 {offsets = [1, 0, 0], sizes = [1, 24, 128], strides = [1, 1, 1]} : vector<2x24x128xf32> to vector<1x24x128xf32>
      %358 = vector.shape_cast %357 : vector<1x24x128xf32> to vector<24x128xf32>
      %359 = vector.broadcast %351 : f32 to vector<24x128xf32>
      %360 = arith.mulf %359, %358 : vector<24x128xf32>
      %361 = arith.addf %356, %360 : vector<24x128xf32>
      %c126_i32_47 = arith.constant 126 : i32
      %362 = tpu.dynamic_rotate %23 by %c126_i32_47 dim 2 : vector<2x24x128xf32>, i32 -> vector<2x24x128xf32>
      %c26 = arith.constant 26 : index
      %363 = memref.load %arg3[%c26] : memref<98xf32, #tpu.memory_space<smem>>
      %c75 = arith.constant 75 : index
      %364 = memref.load %arg3[%c75] : memref<98xf32, #tpu.memory_space<smem>>
      %365 = vector.extract_strided_slice %362 {offsets = [0, 0, 0], sizes = [1, 24, 128], strides = [1, 1, 1]} : vector<2x24x128xf32> to vector<1x24x128xf32>
      %366 = vector.shape_cast %365 : vector<1x24x128xf32> to vector<24x128xf32>
      %367 = vector.broadcast %363 : f32 to vector<24x128xf32>
      %368 = arith.mulf %367, %366 : vector<24x128xf32>
      %369 = arith.addf %361, %368 : vector<24x128xf32>
      %370 = vector.extract_strided_slice %362 {offsets = [1, 0, 0], sizes = [1, 24, 128], strides = [1, 1, 1]} : vector<2x24x128xf32> to vector<1x24x128xf32>
      %371 = vector.shape_cast %370 : vector<1x24x128xf32> to vector<24x128xf32>
      %372 = vector.broadcast %364 : f32 to vector<24x128xf32>
      %373 = arith.mulf %372, %371 : vector<24x128xf32>
      %374 = arith.addf %369, %373 : vector<24x128xf32>
      %c125_i32_48 = arith.constant 125 : i32
      %375 = tpu.dynamic_rotate %23 by %c125_i32_48 dim 2 : vector<2x24x128xf32>, i32 -> vector<2x24x128xf32>
      %c27 = arith.constant 27 : index
      %376 = memref.load %arg3[%c27] : memref<98xf32, #tpu.memory_space<smem>>
      %c76 = arith.constant 76 : index
      %377 = memref.load %arg3[%c76] : memref<98xf32, #tpu.memory_space<smem>>
      %378 = vector.extract_strided_slice %375 {offsets = [0, 0, 0], sizes = [1, 24, 128], strides = [1, 1, 1]} : vector<2x24x128xf32> to vector<1x24x128xf32>
      %379 = vector.shape_cast %378 : vector<1x24x128xf32> to vector<24x128xf32>
      %380 = vector.broadcast %376 : f32 to vector<24x128xf32>
      %381 = arith.mulf %380, %379 : vector<24x128xf32>
      %382 = arith.addf %374, %381 : vector<24x128xf32>
      %383 = vector.extract_strided_slice %375 {offsets = [1, 0, 0], sizes = [1, 24, 128], strides = [1, 1, 1]} : vector<2x24x128xf32> to vector<1x24x128xf32>
      %384 = vector.shape_cast %383 : vector<1x24x128xf32> to vector<24x128xf32>
      %385 = vector.broadcast %377 : f32 to vector<24x128xf32>
      %386 = arith.mulf %385, %384 : vector<24x128xf32>
      %387 = arith.addf %382, %386 : vector<24x128xf32>
      %c23_i32 = arith.constant 23 : i32
      %388 = tpu.dynamic_rotate %23 by %c23_i32 dim 1 : vector<2x24x128xf32>, i32 -> vector<2x24x128xf32>
      %c3_i32_49 = arith.constant 3 : i32
      %389 = tpu.dynamic_rotate %388 by %c3_i32_49 dim 2 : vector<2x24x128xf32>, i32 -> vector<2x24x128xf32>
      %c28 = arith.constant 28 : index
      %390 = memref.load %arg3[%c28] : memref<98xf32, #tpu.memory_space<smem>>
      %c77 = arith.constant 77 : index
      %391 = memref.load %arg3[%c77] : memref<98xf32, #tpu.memory_space<smem>>
      %392 = vector.extract_strided_slice %389 {offsets = [0, 0, 0], sizes = [1, 24, 128], strides = [1, 1, 1]} : vector<2x24x128xf32> to vector<1x24x128xf32>
      %393 = vector.shape_cast %392 : vector<1x24x128xf32> to vector<24x128xf32>
      %394 = vector.broadcast %390 : f32 to vector<24x128xf32>
      %395 = arith.mulf %394, %393 : vector<24x128xf32>
      %396 = arith.addf %387, %395 : vector<24x128xf32>
      %397 = vector.extract_strided_slice %389 {offsets = [1, 0, 0], sizes = [1, 24, 128], strides = [1, 1, 1]} : vector<2x24x128xf32> to vector<1x24x128xf32>
      %398 = vector.shape_cast %397 : vector<1x24x128xf32> to vector<24x128xf32>
      %399 = vector.broadcast %391 : f32 to vector<24x128xf32>
      %400 = arith.mulf %399, %398 : vector<24x128xf32>
      %401 = arith.addf %396, %400 : vector<24x128xf32>
      %c2_i32_50 = arith.constant 2 : i32
      %402 = tpu.dynamic_rotate %388 by %c2_i32_50 dim 2 : vector<2x24x128xf32>, i32 -> vector<2x24x128xf32>
      %c29 = arith.constant 29 : index
      %403 = memref.load %arg3[%c29] : memref<98xf32, #tpu.memory_space<smem>>
      %c78 = arith.constant 78 : index
      %404 = memref.load %arg3[%c78] : memref<98xf32, #tpu.memory_space<smem>>
      %405 = vector.extract_strided_slice %402 {offsets = [0, 0, 0], sizes = [1, 24, 128], strides = [1, 1, 1]} : vector<2x24x128xf32> to vector<1x24x128xf32>
      %406 = vector.shape_cast %405 : vector<1x24x128xf32> to vector<24x128xf32>
      %407 = vector.broadcast %403 : f32 to vector<24x128xf32>
      %408 = arith.mulf %407, %406 : vector<24x128xf32>
      %409 = arith.addf %401, %408 : vector<24x128xf32>
      %410 = vector.extract_strided_slice %402 {offsets = [1, 0, 0], sizes = [1, 24, 128], strides = [1, 1, 1]} : vector<2x24x128xf32> to vector<1x24x128xf32>
      %411 = vector.shape_cast %410 : vector<1x24x128xf32> to vector<24x128xf32>
      %412 = vector.broadcast %404 : f32 to vector<24x128xf32>
      %413 = arith.mulf %412, %411 : vector<24x128xf32>
      %414 = arith.addf %409, %413 : vector<24x128xf32>
      %c1_i32_51 = arith.constant 1 : i32
      %415 = tpu.dynamic_rotate %388 by %c1_i32_51 dim 2 : vector<2x24x128xf32>, i32 -> vector<2x24x128xf32>
      %c30 = arith.constant 30 : index
      %416 = memref.load %arg3[%c30] : memref<98xf32, #tpu.memory_space<smem>>
      %c79 = arith.constant 79 : index
      %417 = memref.load %arg3[%c79] : memref<98xf32, #tpu.memory_space<smem>>
      %418 = vector.extract_strided_slice %415 {offsets = [0, 0, 0], sizes = [1, 24, 128], strides = [1, 1, 1]} : vector<2x24x128xf32> to vector<1x24x128xf32>
      %419 = vector.shape_cast %418 : vector<1x24x128xf32> to vector<24x128xf32>
      %420 = vector.broadcast %416 : f32 to vector<24x128xf32>
      %421 = arith.mulf %420, %419 : vector<24x128xf32>
      %422 = arith.addf %414, %421 : vector<24x128xf32>
      %423 = vector.extract_strided_slice %415 {offsets = [1, 0, 0], sizes = [1, 24, 128], strides = [1, 1, 1]} : vector<2x24x128xf32> to vector<1x24x128xf32>
      %424 = vector.shape_cast %423 : vector<1x24x128xf32> to vector<24x128xf32>
      %425 = vector.broadcast %417 : f32 to vector<24x128xf32>
      %426 = arith.mulf %425, %424 : vector<24x128xf32>
      %427 = arith.addf %422, %426 : vector<24x128xf32>
      %c31 = arith.constant 31 : index
      %428 = memref.load %arg3[%c31] : memref<98xf32, #tpu.memory_space<smem>>
      %c80 = arith.constant 80 : index
      %429 = memref.load %arg3[%c80] : memref<98xf32, #tpu.memory_space<smem>>
      %430 = vector.extract_strided_slice %388 {offsets = [0, 0, 0], sizes = [1, 24, 128], strides = [1, 1, 1]} : vector<2x24x128xf32> to vector<1x24x128xf32>
      %431 = vector.shape_cast %430 : vector<1x24x128xf32> to vector<24x128xf32>
      %432 = vector.broadcast %428 : f32 to vector<24x128xf32>
      %433 = arith.mulf %432, %431 : vector<24x128xf32>
      %434 = arith.addf %427, %433 : vector<24x128xf32>
      %435 = vector.extract_strided_slice %388 {offsets = [1, 0, 0], sizes = [1, 24, 128], strides = [1, 1, 1]} : vector<2x24x128xf32> to vector<1x24x128xf32>
      %436 = vector.shape_cast %435 : vector<1x24x128xf32> to vector<24x128xf32>
      %437 = vector.broadcast %429 : f32 to vector<24x128xf32>
      %438 = arith.mulf %437, %436 : vector<24x128xf32>
      %439 = arith.addf %434, %438 : vector<24x128xf32>
      %c127_i32_52 = arith.constant 127 : i32
      %440 = tpu.dynamic_rotate %388 by %c127_i32_52 dim 2 : vector<2x24x128xf32>, i32 -> vector<2x24x128xf32>
      %c32 = arith.constant 32 : index
      %441 = memref.load %arg3[%c32] : memref<98xf32, #tpu.memory_space<smem>>
      %c81 = arith.constant 81 : index
      %442 = memref.load %arg3[%c81] : memref<98xf32, #tpu.memory_space<smem>>
      %443 = vector.extract_strided_slice %440 {offsets = [0, 0, 0], sizes = [1, 24, 128], strides = [1, 1, 1]} : vector<2x24x128xf32> to vector<1x24x128xf32>
      %444 = vector.shape_cast %443 : vector<1x24x128xf32> to vector<24x128xf32>
      %445 = vector.broadcast %441 : f32 to vector<24x128xf32>
      %446 = arith.mulf %445, %444 : vector<24x128xf32>
      %447 = arith.addf %439, %446 : vector<24x128xf32>
      %448 = vector.extract_strided_slice %440 {offsets = [1, 0, 0], sizes = [1, 24, 128], strides = [1, 1, 1]} : vector<2x24x128xf32> to vector<1x24x128xf32>
      %449 = vector.shape_cast %448 : vector<1x24x128xf32> to vector<24x128xf32>
      %450 = vector.broadcast %442 : f32 to vector<24x128xf32>
      %451 = arith.mulf %450, %449 : vector<24x128xf32>
      %452 = arith.addf %447, %451 : vector<24x128xf32>
      %c126_i32_53 = arith.constant 126 : i32
      %453 = tpu.dynamic_rotate %388 by %c126_i32_53 dim 2 : vector<2x24x128xf32>, i32 -> vector<2x24x128xf32>
      %c33 = arith.constant 33 : index
      %454 = memref.load %arg3[%c33] : memref<98xf32, #tpu.memory_space<smem>>
      %c82 = arith.constant 82 : index
      %455 = memref.load %arg3[%c82] : memref<98xf32, #tpu.memory_space<smem>>
      %456 = vector.extract_strided_slice %453 {offsets = [0, 0, 0], sizes = [1, 24, 128], strides = [1, 1, 1]} : vector<2x24x128xf32> to vector<1x24x128xf32>
      %457 = vector.shape_cast %456 : vector<1x24x128xf32> to vector<24x128xf32>
      %458 = vector.broadcast %454 : f32 to vector<24x128xf32>
      %459 = arith.mulf %458, %457 : vector<24x128xf32>
      %460 = arith.addf %452, %459 : vector<24x128xf32>
      %461 = vector.extract_strided_slice %453 {offsets = [1, 0, 0], sizes = [1, 24, 128], strides = [1, 1, 1]} : vector<2x24x128xf32> to vector<1x24x128xf32>
      %462 = vector.shape_cast %461 : vector<1x24x128xf32> to vector<24x128xf32>
      %463 = vector.broadcast %455 : f32 to vector<24x128xf32>
      %464 = arith.mulf %463, %462 : vector<24x128xf32>
      %465 = arith.addf %460, %464 : vector<24x128xf32>
      %c125_i32_54 = arith.constant 125 : i32
      %466 = tpu.dynamic_rotate %388 by %c125_i32_54 dim 2 : vector<2x24x128xf32>, i32 -> vector<2x24x128xf32>
      %c34 = arith.constant 34 : index
      %467 = memref.load %arg3[%c34] : memref<98xf32, #tpu.memory_space<smem>>
      %c83 = arith.constant 83 : index
      %468 = memref.load %arg3[%c83] : memref<98xf32, #tpu.memory_space<smem>>
      %469 = vector.extract_strided_slice %466 {offsets = [0, 0, 0], sizes = [1, 24, 128], strides = [1, 1, 1]} : vector<2x24x128xf32> to vector<1x24x128xf32>
      %470 = vector.shape_cast %469 : vector<1x24x128xf32> to vector<24x128xf32>
      %471 = vector.broadcast %467 : f32 to vector<24x128xf32>
      %472 = arith.mulf %471, %470 : vector<24x128xf32>
      %473 = arith.addf %465, %472 : vector<24x128xf32>
      %474 = vector.extract_strided_slice %466 {offsets = [1, 0, 0], sizes = [1, 24, 128], strides = [1, 1, 1]} : vector<2x24x128xf32> to vector<1x24x128xf32>
      %475 = vector.shape_cast %474 : vector<1x24x128xf32> to vector<24x128xf32>
      %476 = vector.broadcast %468 : f32 to vector<24x128xf32>
      %477 = arith.mulf %476, %475 : vector<24x128xf32>
      %478 = arith.addf %473, %477 : vector<24x128xf32>
      %c22_i32 = arith.constant 22 : i32
      %479 = tpu.dynamic_rotate %23 by %c22_i32 dim 1 : vector<2x24x128xf32>, i32 -> vector<2x24x128xf32>
      %c3_i32_55 = arith.constant 3 : i32
      %480 = tpu.dynamic_rotate %479 by %c3_i32_55 dim 2 : vector<2x24x128xf32>, i32 -> vector<2x24x128xf32>
      %c35 = arith.constant 35 : index
      %481 = memref.load %arg3[%c35] : memref<98xf32, #tpu.memory_space<smem>>
      %c84 = arith.constant 84 : index
      %482 = memref.load %arg3[%c84] : memref<98xf32, #tpu.memory_space<smem>>
      %483 = vector.extract_strided_slice %480 {offsets = [0, 0, 0], sizes = [1, 24, 128], strides = [1, 1, 1]} : vector<2x24x128xf32> to vector<1x24x128xf32>
      %484 = vector.shape_cast %483 : vector<1x24x128xf32> to vector<24x128xf32>
      %485 = vector.broadcast %481 : f32 to vector<24x128xf32>
      %486 = arith.mulf %485, %484 : vector<24x128xf32>
      %487 = arith.addf %478, %486 : vector<24x128xf32>
      %488 = vector.extract_strided_slice %480 {offsets = [1, 0, 0], sizes = [1, 24, 128], strides = [1, 1, 1]} : vector<2x24x128xf32> to vector<1x24x128xf32>
      %489 = vector.shape_cast %488 : vector<1x24x128xf32> to vector<24x128xf32>
      %490 = vector.broadcast %482 : f32 to vector<24x128xf32>
      %491 = arith.mulf %490, %489 : vector<24x128xf32>
      %492 = arith.addf %487, %491 : vector<24x128xf32>
      %c2_i32_56 = arith.constant 2 : i32
      %493 = tpu.dynamic_rotate %479 by %c2_i32_56 dim 2 : vector<2x24x128xf32>, i32 -> vector<2x24x128xf32>
      %c36 = arith.constant 36 : index
      %494 = memref.load %arg3[%c36] : memref<98xf32, #tpu.memory_space<smem>>
      %c85 = arith.constant 85 : index
      %495 = memref.load %arg3[%c85] : memref<98xf32, #tpu.memory_space<smem>>
      %496 = vector.extract_strided_slice %493 {offsets = [0, 0, 0], sizes = [1, 24, 128], strides = [1, 1, 1]} : vector<2x24x128xf32> to vector<1x24x128xf32>
      %497 = vector.shape_cast %496 : vector<1x24x128xf32> to vector<24x128xf32>
      %498 = vector.broadcast %494 : f32 to vector<24x128xf32>
      %499 = arith.mulf %498, %497 : vector<24x128xf32>
      %500 = arith.addf %492, %499 : vector<24x128xf32>
      %501 = vector.extract_strided_slice %493 {offsets = [1, 0, 0], sizes = [1, 24, 128], strides = [1, 1, 1]} : vector<2x24x128xf32> to vector<1x24x128xf32>
      %502 = vector.shape_cast %501 : vector<1x24x128xf32> to vector<24x128xf32>
      %503 = vector.broadcast %495 : f32 to vector<24x128xf32>
      %504 = arith.mulf %503, %502 : vector<24x128xf32>
      %505 = arith.addf %500, %504 : vector<24x128xf32>
      %c1_i32_57 = arith.constant 1 : i32
      %506 = tpu.dynamic_rotate %479 by %c1_i32_57 dim 2 : vector<2x24x128xf32>, i32 -> vector<2x24x128xf32>
      %c37 = arith.constant 37 : index
      %507 = memref.load %arg3[%c37] : memref<98xf32, #tpu.memory_space<smem>>
      %c86 = arith.constant 86 : index
      %508 = memref.load %arg3[%c86] : memref<98xf32, #tpu.memory_space<smem>>
      %509 = vector.extract_strided_slice %506 {offsets = [0, 0, 0], sizes = [1, 24, 128], strides = [1, 1, 1]} : vector<2x24x128xf32> to vector<1x24x128xf32>
      %510 = vector.shape_cast %509 : vector<1x24x128xf32> to vector<24x128xf32>
      %511 = vector.broadcast %507 : f32 to vector<24x128xf32>
      %512 = arith.mulf %511, %510 : vector<24x128xf32>
      %513 = arith.addf %505, %512 : vector<24x128xf32>
      %514 = vector.extract_strided_slice %506 {offsets = [1, 0, 0], sizes = [1, 24, 128], strides = [1, 1, 1]} : vector<2x24x128xf32> to vector<1x24x128xf32>
      %515 = vector.shape_cast %514 : vector<1x24x128xf32> to vector<24x128xf32>
      %516 = vector.broadcast %508 : f32 to vector<24x128xf32>
      %517 = arith.mulf %516, %515 : vector<24x128xf32>
      %518 = arith.addf %513, %517 : vector<24x128xf32>
      %c38 = arith.constant 38 : index
      %519 = memref.load %arg3[%c38] : memref<98xf32, #tpu.memory_space<smem>>
      %c87 = arith.constant 87 : index
      %520 = memref.load %arg3[%c87] : memref<98xf32, #tpu.memory_space<smem>>
      %521 = vector.extract_strided_slice %479 {offsets = [0, 0, 0], sizes = [1, 24, 128], strides = [1, 1, 1]} : vector<2x24x128xf32> to vector<1x24x128xf32>
      %522 = vector.shape_cast %521 : vector<1x24x128xf32> to vector<24x128xf32>
      %523 = vector.broadcast %519 : f32 to vector<24x128xf32>
      %524 = arith.mulf %523, %522 : vector<24x128xf32>
      %525 = arith.addf %518, %524 : vector<24x128xf32>
      %526 = vector.extract_strided_slice %479 {offsets = [1, 0, 0], sizes = [1, 24, 128], strides = [1, 1, 1]} : vector<2x24x128xf32> to vector<1x24x128xf32>
      %527 = vector.shape_cast %526 : vector<1x24x128xf32> to vector<24x128xf32>
      %528 = vector.broadcast %520 : f32 to vector<24x128xf32>
      %529 = arith.mulf %528, %527 : vector<24x128xf32>
      %530 = arith.addf %525, %529 : vector<24x128xf32>
      %c127_i32_58 = arith.constant 127 : i32
      %531 = tpu.dynamic_rotate %479 by %c127_i32_58 dim 2 : vector<2x24x128xf32>, i32 -> vector<2x24x128xf32>
      %c39 = arith.constant 39 : index
      %532 = memref.load %arg3[%c39] : memref<98xf32, #tpu.memory_space<smem>>
      %c88 = arith.constant 88 : index
      %533 = memref.load %arg3[%c88] : memref<98xf32, #tpu.memory_space<smem>>
      %534 = vector.extract_strided_slice %531 {offsets = [0, 0, 0], sizes = [1, 24, 128], strides = [1, 1, 1]} : vector<2x24x128xf32> to vector<1x24x128xf32>
      %535 = vector.shape_cast %534 : vector<1x24x128xf32> to vector<24x128xf32>
      %536 = vector.broadcast %532 : f32 to vector<24x128xf32>
      %537 = arith.mulf %536, %535 : vector<24x128xf32>
      %538 = arith.addf %530, %537 : vector<24x128xf32>
      %539 = vector.extract_strided_slice %531 {offsets = [1, 0, 0], sizes = [1, 24, 128], strides = [1, 1, 1]} : vector<2x24x128xf32> to vector<1x24x128xf32>
      %540 = vector.shape_cast %539 : vector<1x24x128xf32> to vector<24x128xf32>
      %541 = vector.broadcast %533 : f32 to vector<24x128xf32>
      %542 = arith.mulf %541, %540 : vector<24x128xf32>
      %543 = arith.addf %538, %542 : vector<24x128xf32>
      %c126_i32_59 = arith.constant 126 : i32
      %544 = tpu.dynamic_rotate %479 by %c126_i32_59 dim 2 : vector<2x24x128xf32>, i32 -> vector<2x24x128xf32>
      %c40 = arith.constant 40 : index
      %545 = memref.load %arg3[%c40] : memref<98xf32, #tpu.memory_space<smem>>
      %c89 = arith.constant 89 : index
      %546 = memref.load %arg3[%c89] : memref<98xf32, #tpu.memory_space<smem>>
      %547 = vector.extract_strided_slice %544 {offsets = [0, 0, 0], sizes = [1, 24, 128], strides = [1, 1, 1]} : vector<2x24x128xf32> to vector<1x24x128xf32>
      %548 = vector.shape_cast %547 : vector<1x24x128xf32> to vector<24x128xf32>
      %549 = vector.broadcast %545 : f32 to vector<24x128xf32>
      %550 = arith.mulf %549, %548 : vector<24x128xf32>
      %551 = arith.addf %543, %550 : vector<24x128xf32>
      %552 = vector.extract_strided_slice %544 {offsets = [1, 0, 0], sizes = [1, 24, 128], strides = [1, 1, 1]} : vector<2x24x128xf32> to vector<1x24x128xf32>
      %553 = vector.shape_cast %552 : vector<1x24x128xf32> to vector<24x128xf32>
      %554 = vector.broadcast %546 : f32 to vector<24x128xf32>
      %555 = arith.mulf %554, %553 : vector<24x128xf32>
      %556 = arith.addf %551, %555 : vector<24x128xf32>
      %c125_i32_60 = arith.constant 125 : i32
      %557 = tpu.dynamic_rotate %479 by %c125_i32_60 dim 2 : vector<2x24x128xf32>, i32 -> vector<2x24x128xf32>
      %c41 = arith.constant 41 : index
      %558 = memref.load %arg3[%c41] : memref<98xf32, #tpu.memory_space<smem>>
      %c90 = arith.constant 90 : index
      %559 = memref.load %arg3[%c90] : memref<98xf32, #tpu.memory_space<smem>>
      %560 = vector.extract_strided_slice %557 {offsets = [0, 0, 0], sizes = [1, 24, 128], strides = [1, 1, 1]} : vector<2x24x128xf32> to vector<1x24x128xf32>
      %561 = vector.shape_cast %560 : vector<1x24x128xf32> to vector<24x128xf32>
      %562 = vector.broadcast %558 : f32 to vector<24x128xf32>
      %563 = arith.mulf %562, %561 : vector<24x128xf32>
      %564 = arith.addf %556, %563 : vector<24x128xf32>
      %565 = vector.extract_strided_slice %557 {offsets = [1, 0, 0], sizes = [1, 24, 128], strides = [1, 1, 1]} : vector<2x24x128xf32> to vector<1x24x128xf32>
      %566 = vector.shape_cast %565 : vector<1x24x128xf32> to vector<24x128xf32>
      %567 = vector.broadcast %559 : f32 to vector<24x128xf32>
      %568 = arith.mulf %567, %566 : vector<24x128xf32>
      %569 = arith.addf %564, %568 : vector<24x128xf32>
      %c21_i32 = arith.constant 21 : i32
      %570 = tpu.dynamic_rotate %23 by %c21_i32 dim 1 : vector<2x24x128xf32>, i32 -> vector<2x24x128xf32>
      %c3_i32_61 = arith.constant 3 : i32
      %571 = tpu.dynamic_rotate %570 by %c3_i32_61 dim 2 : vector<2x24x128xf32>, i32 -> vector<2x24x128xf32>
      %c42 = arith.constant 42 : index
      %572 = memref.load %arg3[%c42] : memref<98xf32, #tpu.memory_space<smem>>
      %c91 = arith.constant 91 : index
      %573 = memref.load %arg3[%c91] : memref<98xf32, #tpu.memory_space<smem>>
      %574 = vector.extract_strided_slice %571 {offsets = [0, 0, 0], sizes = [1, 24, 128], strides = [1, 1, 1]} : vector<2x24x128xf32> to vector<1x24x128xf32>
      %575 = vector.shape_cast %574 : vector<1x24x128xf32> to vector<24x128xf32>
      %576 = vector.broadcast %572 : f32 to vector<24x128xf32>
      %577 = arith.mulf %576, %575 : vector<24x128xf32>
      %578 = arith.addf %569, %577 : vector<24x128xf32>
      %579 = vector.extract_strided_slice %571 {offsets = [1, 0, 0], sizes = [1, 24, 128], strides = [1, 1, 1]} : vector<2x24x128xf32> to vector<1x24x128xf32>
      %580 = vector.shape_cast %579 : vector<1x24x128xf32> to vector<24x128xf32>
      %581 = vector.broadcast %573 : f32 to vector<24x128xf32>
      %582 = arith.mulf %581, %580 : vector<24x128xf32>
      %583 = arith.addf %578, %582 : vector<24x128xf32>
      %c2_i32_62 = arith.constant 2 : i32
      %584 = tpu.dynamic_rotate %570 by %c2_i32_62 dim 2 : vector<2x24x128xf32>, i32 -> vector<2x24x128xf32>
      %c43 = arith.constant 43 : index
      %585 = memref.load %arg3[%c43] : memref<98xf32, #tpu.memory_space<smem>>
      %c92 = arith.constant 92 : index
      %586 = memref.load %arg3[%c92] : memref<98xf32, #tpu.memory_space<smem>>
      %587 = vector.extract_strided_slice %584 {offsets = [0, 0, 0], sizes = [1, 24, 128], strides = [1, 1, 1]} : vector<2x24x128xf32> to vector<1x24x128xf32>
      %588 = vector.shape_cast %587 : vector<1x24x128xf32> to vector<24x128xf32>
      %589 = vector.broadcast %585 : f32 to vector<24x128xf32>
      %590 = arith.mulf %589, %588 : vector<24x128xf32>
      %591 = arith.addf %583, %590 : vector<24x128xf32>
      %592 = vector.extract_strided_slice %584 {offsets = [1, 0, 0], sizes = [1, 24, 128], strides = [1, 1, 1]} : vector<2x24x128xf32> to vector<1x24x128xf32>
      %593 = vector.shape_cast %592 : vector<1x24x128xf32> to vector<24x128xf32>
      %594 = vector.broadcast %586 : f32 to vector<24x128xf32>
      %595 = arith.mulf %594, %593 : vector<24x128xf32>
      %596 = arith.addf %591, %595 : vector<24x128xf32>
      %c1_i32_63 = arith.constant 1 : i32
      %597 = tpu.dynamic_rotate %570 by %c1_i32_63 dim 2 : vector<2x24x128xf32>, i32 -> vector<2x24x128xf32>
      %c44 = arith.constant 44 : index
      %598 = memref.load %arg3[%c44] : memref<98xf32, #tpu.memory_space<smem>>
      %c93 = arith.constant 93 : index
      %599 = memref.load %arg3[%c93] : memref<98xf32, #tpu.memory_space<smem>>
      %600 = vector.extract_strided_slice %597 {offsets = [0, 0, 0], sizes = [1, 24, 128], strides = [1, 1, 1]} : vector<2x24x128xf32> to vector<1x24x128xf32>
      %601 = vector.shape_cast %600 : vector<1x24x128xf32> to vector<24x128xf32>
      %602 = vector.broadcast %598 : f32 to vector<24x128xf32>
      %603 = arith.mulf %602, %601 : vector<24x128xf32>
      %604 = arith.addf %596, %603 : vector<24x128xf32>
      %605 = vector.extract_strided_slice %597 {offsets = [1, 0, 0], sizes = [1, 24, 128], strides = [1, 1, 1]} : vector<2x24x128xf32> to vector<1x24x128xf32>
      %606 = vector.shape_cast %605 : vector<1x24x128xf32> to vector<24x128xf32>
      %607 = vector.broadcast %599 : f32 to vector<24x128xf32>
      %608 = arith.mulf %607, %606 : vector<24x128xf32>
      %609 = arith.addf %604, %608 : vector<24x128xf32>
      %c45 = arith.constant 45 : index
      %610 = memref.load %arg3[%c45] : memref<98xf32, #tpu.memory_space<smem>>
      %c94 = arith.constant 94 : index
      %611 = memref.load %arg3[%c94] : memref<98xf32, #tpu.memory_space<smem>>
      %612 = vector.extract_strided_slice %570 {offsets = [0, 0, 0], sizes = [1, 24, 128], strides = [1, 1, 1]} : vector<2x24x128xf32> to vector<1x24x128xf32>
      %613 = vector.shape_cast %612 : vector<1x24x128xf32> to vector<24x128xf32>
      %614 = vector.broadcast %610 : f32 to vector<24x128xf32>
      %615 = arith.mulf %614, %613 : vector<24x128xf32>
      %616 = arith.addf %609, %615 : vector<24x128xf32>
      %617 = vector.extract_strided_slice %570 {offsets = [1, 0, 0], sizes = [1, 24, 128], strides = [1, 1, 1]} : vector<2x24x128xf32> to vector<1x24x128xf32>
      %618 = vector.shape_cast %617 : vector<1x24x128xf32> to vector<24x128xf32>
      %619 = vector.broadcast %611 : f32 to vector<24x128xf32>
      %620 = arith.mulf %619, %618 : vector<24x128xf32>
      %621 = arith.addf %616, %620 : vector<24x128xf32>
      %c127_i32_64 = arith.constant 127 : i32
      %622 = tpu.dynamic_rotate %570 by %c127_i32_64 dim 2 : vector<2x24x128xf32>, i32 -> vector<2x24x128xf32>
      %c46 = arith.constant 46 : index
      %623 = memref.load %arg3[%c46] : memref<98xf32, #tpu.memory_space<smem>>
      %c95 = arith.constant 95 : index
      %624 = memref.load %arg3[%c95] : memref<98xf32, #tpu.memory_space<smem>>
      %625 = vector.extract_strided_slice %622 {offsets = [0, 0, 0], sizes = [1, 24, 128], strides = [1, 1, 1]} : vector<2x24x128xf32> to vector<1x24x128xf32>
      %626 = vector.shape_cast %625 : vector<1x24x128xf32> to vector<24x128xf32>
      %627 = vector.broadcast %623 : f32 to vector<24x128xf32>
      %628 = arith.mulf %627, %626 : vector<24x128xf32>
      %629 = arith.addf %621, %628 : vector<24x128xf32>
      %630 = vector.extract_strided_slice %622 {offsets = [1, 0, 0], sizes = [1, 24, 128], strides = [1, 1, 1]} : vector<2x24x128xf32> to vector<1x24x128xf32>
      %631 = vector.shape_cast %630 : vector<1x24x128xf32> to vector<24x128xf32>
      %632 = vector.broadcast %624 : f32 to vector<24x128xf32>
      %633 = arith.mulf %632, %631 : vector<24x128xf32>
      %634 = arith.addf %629, %633 : vector<24x128xf32>
      %c126_i32_65 = arith.constant 126 : i32
      %635 = tpu.dynamic_rotate %570 by %c126_i32_65 dim 2 : vector<2x24x128xf32>, i32 -> vector<2x24x128xf32>
      %c47 = arith.constant 47 : index
      %636 = memref.load %arg3[%c47] : memref<98xf32, #tpu.memory_space<smem>>
      %c96 = arith.constant 96 : index
      %637 = memref.load %arg3[%c96] : memref<98xf32, #tpu.memory_space<smem>>
      %638 = vector.extract_strided_slice %635 {offsets = [0, 0, 0], sizes = [1, 24, 128], strides = [1, 1, 1]} : vector<2x24x128xf32> to vector<1x24x128xf32>
      %639 = vector.shape_cast %638 : vector<1x24x128xf32> to vector<24x128xf32>
      %640 = vector.broadcast %636 : f32 to vector<24x128xf32>
      %641 = arith.mulf %640, %639 : vector<24x128xf32>
      %642 = arith.addf %634, %641 : vector<24x128xf32>
      %643 = vector.extract_strided_slice %635 {offsets = [1, 0, 0], sizes = [1, 24, 128], strides = [1, 1, 1]} : vector<2x24x128xf32> to vector<1x24x128xf32>
      %644 = vector.shape_cast %643 : vector<1x24x128xf32> to vector<24x128xf32>
      %645 = vector.broadcast %637 : f32 to vector<24x128xf32>
      %646 = arith.mulf %645, %644 : vector<24x128xf32>
      %647 = arith.addf %642, %646 : vector<24x128xf32>
      %c125_i32_66 = arith.constant 125 : i32
      %648 = tpu.dynamic_rotate %570 by %c125_i32_66 dim 2 : vector<2x24x128xf32>, i32 -> vector<2x24x128xf32>
      %c48 = arith.constant 48 : index
      %649 = memref.load %arg3[%c48] : memref<98xf32, #tpu.memory_space<smem>>
      %c97 = arith.constant 97 : index
      %650 = memref.load %arg3[%c97] : memref<98xf32, #tpu.memory_space<smem>>
      %651 = vector.extract_strided_slice %648 {offsets = [0, 0, 0], sizes = [1, 24, 128], strides = [1, 1, 1]} : vector<2x24x128xf32> to vector<1x24x128xf32>
      %652 = vector.shape_cast %651 : vector<1x24x128xf32> to vector<24x128xf32>
      %653 = vector.broadcast %649 : f32 to vector<24x128xf32>
      %654 = arith.mulf %653, %652 : vector<24x128xf32>
      %655 = arith.addf %647, %654 : vector<24x128xf32>
      %656 = vector.extract_strided_slice %648 {offsets = [1, 0, 0], sizes = [1, 24, 128], strides = [1, 1, 1]} : vector<2x24x128xf32> to vector<1x24x128xf32>
      %657 = vector.shape_cast %656 : vector<1x24x128xf32> to vector<24x128xf32>
      %658 = vector.broadcast %650 : f32 to vector<24x128xf32>
      %659 = arith.mulf %658, %657 : vector<24x128xf32>
      %660 = arith.addf %655, %659 : vector<24x128xf32>
      %661 = vector.extract_strided_slice %660 {offsets = [0, 0], sizes = [16, 16], strides = [1, 1]} : vector<24x128xf32> to vector<16x16xf32>
      %662 = arith.negf %661 : vector<16x16xf32>
      %663 = math.exp %662 : vector<16x16xf32>
      %cst_67 = arith.constant 1.000000e+00 : f32
      %664 = vector.broadcast %cst_67 : f32 to vector<16x16xf32>
      %665 = arith.addf %664, %663 : vector<16x16xf32>
      %666 = arith.divf %664, %665 : vector<16x16xf32>
      %667 = vector.shape_cast %666 : vector<16x16xf32> to vector<1x1x16x16xf32>
      %c0_68 = arith.constant 0 : index
      %c0_69 = arith.constant 0 : index
      %c0_70 = arith.constant 0 : index
      %c0_71 = arith.constant 0 : index
      %668 = vector.load %arg4[%c0_68, %c0_69, %c0_70, %c0_71] : memref<1x1x16x16xf32, #tpu.memory_space<vmem>>, vector<1x1x16x16xf32>
      tpu.vector_store %arg4[%c0_68, %c0_69, %c0_70, %c0_71], %667 {strides = array<i32>} : memref<1x1x16x16xf32, #tpu.memory_space<vmem>>, vector<1x1x16x16xf32>,
    } else {
    }
    return
  }
  func.func @transform_0(%arg0: i32, %arg1: i32) -> (i32, i32, i32, i32) {
    %c0_i32 = arith.constant 0 : i32
    %c0_i32_0 = arith.constant 0 : i32
    %c0_i32_1 = arith.constant 0 : i32
    return %arg0, %arg1, %c0_i32, %c0_i32_0 : i32, i32, i32, i32
  }
  func.func @transform_1(%arg0: i32, %arg1: i32) -> i32 {
    %c0_i32 = arith.constant 0 : i32
    %c0_i32_0 = arith.constant 0 : i32
    return %c0_i32 : i32
  }
  func.func @transform_2(%arg0: i32, %arg1: i32) -> (i32, i32, i32, i32) {
    %c0_i32 = arith.constant 0 : i32
    %c0_i32_0 = arith.constant 0 : i32
    %c0_i32_1 = arith.constant 0 : i32
    %c0_i32_2 = arith.constant 0 : i32
    return %arg0, %c0_i32, %c0_i32_0, %c0_i32_1 : i32, i32, i32, i32
  }
}

</mosaic_0001>

<llo_original>
// kernel: spatial_attention.1
$region0: #{spatial_attention.1}
  #allocation0 [shape = 'u32[]', space=smem, size = 0x4, offset = 0x4, fixed_abs, tag = 'smem constant byte address 0x4 - core index']
  #allocation1 [shape = 'u32[144,128]{1,0:T(1,128)}', space=vmem, size = 0x12000, scoped, tag = 'internal scratch']
  #allocation2 [shape = 'f32[16,16]{1,0:T(8,128)}', space=vmem, size = 0x2000, scoped, tag = 'scratch operand']
  #allocation3 [shape = 'f32[16,16]{1,0:T(8,128)}', space=vmem, size = 0x2000, scoped, tag = 'scratch operand']
  #allocation4 [shape = 'f32[2,24,128]{2,1,0:T(8,128)}', space=vmem, size = 0x6000, scoped, tag = 'scratch operand']
  %s0 = inlined_call_operand.hbm [shape: f32[2,4,16,16], index: 0, kind: input, shape index: {}]
  %s1 = inlined_call_operand.vmem [shape: f32[98], index: 1, kind: input, shape index: {}]
  %s2 = inlined_call_operand.hbm [shape: f32[2,1,16,16], index: 2, kind: output, shape index: {}]
  %s3 = sld [smem:[#allocation0]]
  $region61: #{spatial_attention.1} parent=0
    _
  %s5 = ssub.s32 1, %s3
  %s6 = scalar_select 0, %s5, %s3
  $region1: #{spatial_attention.1} parent=0
    #allocation5 [shape = 'u8[65536]{0}', space=vmem, size = 0x10000, scoped, tag = 'input window, operand 0']
    #allocation6 [shape = 's32[2]{0}', space=sflag, size = 0x8, scoped, tag = 'scoped memory for spatial_attention.1']
    #allocation7 [shape = 's32[2]{0}', space=sflag, size = 0x8, scoped, tag = 'scoped memory for spatial_attention.1']
    #allocation8 [shape = 's32[2]{0}', space=sflag, size = 0x8, scoped, tag = 'scoped memory for spatial_attention.1']
    #allocation9 [shape = 'u8[512]{0}', space=smem, size = 0x200, scoped, tag = 'input window, operand 1, single buffered']
    #allocation10 [shape = 'u8[16384]{0}', space=vmem, size = 0x4000, scoped, tag = 'output window, operand 0']
    %7 = vsyncpa [#allocation6], 0
    %s8 = scalar_lea.sflag [#allocation6], 1
    %9 = vsyncpa %s8, 0
    %10 = vsyncpa [#allocation8], 0
    %11 = vsyncpa [#allocation7], 0
    %s12 = scalar_lea.sflag [#allocation7], 1
    %13 = vsyncpa %s12, 0
    loop: start=0, step=1, limit=4
    $region2: #{spatial_attention.1} parent=1 // loop_pre_header
      _
    $region3: #{spatial_attention.1} parent=1 // loop_header
      %s15 = sphi 0, %s19
      %p16 = scmp.ge.s32.totalorder %s15, 4
      %s22 = sphi 0, %s34
      %s23 = sphi 0, %s30
      %s24 = sphi 0, %s22
      %s25 = sphi 0, %s23
      %s26 = sphi 0, %s24
      %s27 = sphi 0, %s25
      %s39 = sphi 0, %s41
      %s42 = sphi 0, %s39
      %s43 = sphi 0, %s42
      %s59 = sphi 0, %s43
      %s63 = sphi 0, %s63
      %s65 = sphi 0, %s63
      %s66 = sphi 0, %s65
      %s80 = sphi 0, %s66
      %s86 = sphi 0, %s88
      %s89 = sphi 0, %s86
      %s90 = sphi 0, %s89
      %s106 = sphi 0, %s90
    $region4: #{spatial_attention.1} parent=1 // loop_header_branch
      %18 = sbr.rel (%p16) target = $region8
    $region5: #{spatial_attention.1} parent=1 // loop_body
      %s20 = ssub.s32 %s15, 1
      %s21 = ssub.s32 %s15, 2
      %s28 = sadd.s32 1, %s23
      %p29 = scmp.ge.s32.totalorder %s28, 1
      %s30 = scalar_select %p29, 0, %s28
      %s31 = sadd.s32 1, %s22
      %s32 = scalar_select %p29, %s31, %s22
      %p33 = scmp.ge.s32.totalorder %s32, 2
      %s34 = scalar_select %p33, 0, %s32
      %s35 = ssub.s32 %s22, %s34
      %s36 = ssub.s32 %s23, %s30
      %s37 = sor.u32 %s35, %s36
      %p38 = scmp.eq.s32.totalorder %s37, 0
      %s40 = sadd.s32 %s39, 1
      %s41 = scalar_select %p38, %s39, %s40
      %p44 = pneg %p38
      %p45 = scmp.eq.s32.totalorder %s15, 1
      %p46 = por %p44, %p45
      %p47 = scmp.ne.s32.totalorder %s39, %s42
      %p48 = scmp.eq.s32.totalorder %s15, 0
      %p49 = por %p47, %p48
      %p50 = scmp.ne.s32.totalorder %s39, %s42
      %p51 = scmp.eq.s32.totalorder %s20, 1
      %p52 = por %p50, %p51
      %p53 = scmp.ne.s32.totalorder %s42, %s43
      %p54 = scmp.eq.s32.totalorder %s20, 0
      %p55 = por %p53, %p54
      %p56 = scmp.ne.s32.totalorder %s42, %s43
      %p57 = scmp.eq.s32.totalorder %s21, 1
      %p58 = por %p56, %p57
      %p60 = scmp.ne.s32.totalorder %s43, %s59
      %p61 = scmp.eq.s32.totalorder %s21, 0
      %p62 = por %p60, %p61
      %s64 = sadd.s32 %s63, 1
      %p67 = scmp.eq.s32.totalorder %s15, 1
      %p68 = scmp.ne.s32.totalorder %s63, %s65
      %p69 = scmp.eq.s32.totalorder %s15, 0
      %p70 = por %p68, %p69
      %p71 = scmp.ne.s32.totalorder %s63, %s65
      %p72 = scmp.eq.s32.totalorder %s20, 1
      %p73 = por %p71, %p72
      %p74 = scmp.ne.s32.totalorder %s65, %s66
      %p75 = scmp.eq.s32.totalorder %s20, 0
      %p76 = por %p74, %p75
      %p77 = scmp.ne.s32.totalorder %s65, %s66
      %p78 = scmp.eq.s32.totalorder %s21, 1
      %p79 = por %p77, %p78
      %p81 = scmp.ne.s32.totalorder %s66, %s80
      %p82 = scmp.eq.s32.totalorder %s21, 0
      %p83 = por %p81, %p82
      %s84 = ssub.s32 %s22, %s34
      %p85 = scmp.eq.s32.totalorder %s84, 0
      %s87 = sadd.s32 %s86, 1
      %s88 = scalar_select %p85, %s86, %s87
      %p91 = pneg %p85
      %p92 = scmp.eq.s32.totalorder %s15, 1
      %p93 = por %p91, %p92
      %p94 = scmp.ne.s32.totalorder %s86, %s89
      %p95 = scmp.eq.s32.totalorder %s15, 0
      %p96 = por %p94, %p95
      %p97 = scmp.ne.s32.totalorder %s86, %s89
      %p98 = scmp.eq.s32.totalorder %s20, 1
      %p99 = por %p97, %p98
      %p100 = scmp.ne.s32.totalorder %s89, %s90
      %p101 = scmp.eq.s32.totalorder %s20, 0
      %p102 = por %p100, %p101
      %p103 = scmp.ne.s32.totalorder %s89, %s90
      %p104 = scmp.eq.s32.totalorder %s21, 1
      %p105 = por %p103, %p104
      %p107 = scmp.ne.s32.totalorder %s90, %s106
      %p108 = scmp.eq.s32.totalorder %s21, 0
      %p109 = por %p107, %p108
      %p110 = scmp.le.s32.totalorder 1, %s15
      %p111 = scmp.lt.s32.totalorder %s15, 3
      %p112 = pnand %p110, %p111
      %p113 = pneg %p112
      // Predicated region
      $region9: #{spatial_attention.1} parent=5 // pred_check
        _
      $region10: #{spatial_attention.1} parent=5 // pred_check_branch
        %115 = sbr.rel (%p112) target = $region12
      $region11: #{spatial_attention.1} parent=5 // pred_region
        %s116 = ssub.s32 %s15, 1
        // Predicated region
        $region13: #{spatial_attention.1} parent=11 // pred_check
          %p117 = pneg %p76
        $region14: #{spatial_attention.1} parent=11 // pred_check_branch
          %119 = sbr.rel (%p117) target = $region16
        $region15: #{spatial_attention.1} parent=11 // pred_region
          %s121 = ssub.s32 16, 16
          %122 = vsyncadd [#allocation8], %s121
          %s124 = sshll.u32 %s1, 4
          %s125 = int_to_ptr.vmem [resolvable:$true] %s124
          %127 = dma.vmem_to_smem %s125, 16, [#allocation9], [#allocation8]
        $region16: #{spatial_attention.1} parent=11 // pred_fallthru
          _
      $region12: #{spatial_attention.1} parent=5 // pred_fallthru
        _
      %p128 = scmp.lt.s32.totalorder %s15, 2
      // Predicated region
      $region17: #{spatial_attention.1} parent=5 // pred_check
        %p129 = pneg %p128
      $region18: #{spatial_attention.1} parent=5 // pred_check_branch
        %131 = sbr.rel (%p129) target = $region20
      $region19: #{spatial_attention.1} parent=5 // pred_region
        // Predicated region
        $region21: #{spatial_attention.1} parent=19 // pred_check
          %p132 = pneg %p49
        $region22: #{spatial_attention.1} parent=19 // pred_check_branch
          %134 = sbr.rel (%p132) target = $region24
        $region23: #{spatial_attention.1} parent=19 // pred_region
          %s135 = sand.u32 %s39, 1
          %s136 = scalar_lea.sflag [#allocation6], %s135
          %s137 = sand.u32 %s39, 1
          %s138 = smul.addr %s137, 64
          %s139 = scalar_lea.vmem [#allocation5], %s138
          %s140 = smul.u32 4, %s23
          %s142 = ssub.s32 1024, 1024
          %143 = vsyncadd %s136, %s142
          %s144 = smul.addr %s140, 2
          %s145 = smul.addr %s22, 8
          %s146 = sadd.s32 %s144, %s145
          %s147 = smul.addr %s146, 128
          %s148 = scalar_lea.hbm %s0, %s147
          %s149 = sshll.u32 %s139, 4
          %s150 = int_to_ptr.vmem [resolvable:$true] %s149
          %155 = dma.hbm_to_vmem [thread:$0]  %s148, 1024, %s150, %s136, 128, 128, 8
        $region24: #{spatial_attention.1} parent=19 // pred_fallthru
          _
      $region20: #{spatial_attention.1} parent=5 // pred_fallthru
        _
      %p156 = scmp.le.s32.totalorder 1, %s15
      %p157 = scmp.lt.s32.totalorder %s15, 3
      %p158 = pnand %p156, %p157
      %p159 = pneg %p158
      // Predicated region
      $region25: #{spatial_attention.1} parent=5 // pred_check
        _
      $region26: #{spatial_attention.1} parent=5 // pred_check_branch
        %161 = sbr.rel (%p158) target = $region28
      $region27: #{spatial_attention.1} parent=5 // pred_region
        %s162 = ssub.s32 %s15, 1
        %s163 = sand.u32 %s42, 1
        %s164 = scalar_lea.sflag [#allocation6], %s163
        %s165 = sand.u32 %s42, 1
        %s166 = smul.addr %s165, 64
        %s167 = scalar_lea.vmem [#allocation5], %s166
        // Predicated region
        $region29: #{spatial_attention.1} parent=27 // pred_check
          %p168 = pneg %p55
        $region30: #{spatial_attention.1} parent=27 // pred_check_branch
          %170 = sbr.rel (%p168) target = $region32
        $region31: #{spatial_attention.1} parent=27 // pred_region
          %171 = dma.done %s164, 1024
        $region32: #{spatial_attention.1} parent=27 // pred_fallthru
          _
        // Predicated region
        $region33: #{spatial_attention.1} parent=27 // pred_check
          %p172 = pneg %p76
        $region34: #{spatial_attention.1} parent=27 // pred_check_branch
          %174 = sbr.rel (%p172) target = $region36
        $region35: #{spatial_attention.1} parent=27 // pred_region
          %175 = dma.done [#allocation8], 16
        $region36: #{spatial_attention.1} parent=27 // pred_fallthru
          _
        %176 = sfence
        %s177 = sand.u32 %s42, 1
        %s178 = scalar_lea.sflag [#allocation6], %s177
        %s179 = sand.u32 %s42, 1
        %s180 = smul.addr %s179, 64
        %s181 = scalar_lea.vmem [#allocation5], %s180
        %p182 = pneg %p55
        %p183 = pneg %p52
        %p184 = pneg %p76
        %p185 = pneg %p73
        %p186 = pneg %p102
        %p187 = pneg %p99
        %s188 = sand.u32 %s89, 1
        %s189 = scalar_lea.sflag [#allocation7], %s188
        %s190 = sand.u32 %s89, 1
        %s191 = smul.addr %s190, 16
        %s192 = scalar_lea.vmem [#allocation10], %s191
        %s193 = smul.u32 4, %s25
        %v194 = vld [vmem:[%s167] sm:$0xff]
        %v195 = vld [vmem:[%s167 + $0x8] sm:$0xff]
        %v196 = vld [vmem:[%s167 + $0x10] sm:$0xff]
        %v197 = vld [vmem:[%s167 + $0x18] sm:$0xff]
        %v198 = vld [vmem:[%s167 + $0x20] sm:$0xff]
        %v199 = vld [vmem:[%s167 + $0x28] sm:$0xff]
        %v200 = vld [vmem:[%s167 + $0x30] sm:$0xff]
        %v201 = vld [vmem:[%s167 + $0x38] sm:$0xff]
        %vm202 = vcmask 130048
        %v203 = vsel %vm202, %v194, 0.0
        %v204 = vsel %vm202, %v196, 0.0
        %v205 = vadd.f32 %v203, %v204
        %v206 = vsel %vm202, %v198, 0.0
        %v207 = vadd.f32 %v205, %v206
        %v208 = vsel %vm202, %v200, 0.0
        %v209 = vadd.f32 %v207, %v208
        %v210 = vsel %vm202, %v195, 0.0
        %v211 = vsel %vm202, %v197, 0.0
        %v212 = vadd.f32 %v210, %v211
        %v213 = vsel %vm202, %v199, 0.0
        %v214 = vadd.f32 %v212, %v213
        %v215 = vsel %vm202, %v201, 0.0
        %v216 = vadd.f32 %v214, %v215
        %v217 = vsel %vm202, %v194, -inf
        %v218 = vsel %vm202, %v196, -inf
        %v219 = vsel %vm202, %v198, -inf
        %v220 = vmax.f32 %v217, %v219
        %v221 = vsel %vm202, %v200, -inf
        %v222 = vmax.f32 %v218, %v221
        %v223 = vmax.f32 %v220, %v222
        %v224 = vsel %vm202, %v195, -inf
        %v225 = vsel %vm202, %v197, -inf
        %v226 = vsel %vm202, %v199, -inf
        %v227 = vmax.f32 %v224, %v226
        %v228 = vsel %vm202, %v201, -inf
        %v229 = vmax.f32 %v225, %v228
        %v230 = vmax.f32 %v227, %v229
        %p231 = scmp.eq.s32.totalorder %s25, 0
        // Predicated region
        $region37: #{spatial_attention.1} parent=27 // pred_check
          %p232 = pneg %p231
        $region38: #{spatial_attention.1} parent=27 // pred_check_branch
          %234 = sbr.rel (%p232) target = $region40
        $region39: #{spatial_attention.1} parent=27 // pred_region
          %235 = vst.msk [vmem:[#allocation2] sm:$0xff] %vm202, %v209
          %236 = vst.msk [vmem:[#allocation2 + $0x8] sm:$0xff] %vm202, %v216
          %237 = vst.msk [vmem:[#allocation3] sm:$0xff] %vm202, %v223
          %238 = vst.msk [vmem:[#allocation3 + $0x8] sm:$0xff] %vm202, %v230
        $region40: #{spatial_attention.1} parent=27 // pred_fallthru
          _
        %p239 = scmp.gt.s32.totalorder %s25, 0
        // Predicated region
        $region41: #{spatial_attention.1} parent=27 // pred_check
          %p240 = pneg %p239
        $region42: #{spatial_attention.1} parent=27 // pred_check_branch
          %242 = sbr.rel (%p240) target = $region44
        $region43: #{spatial_attention.1} parent=27 // pred_region
          %v243 = vld [vmem:[#allocation2] sm:$0xff]
          %v244 = vld [vmem:[#allocation2 + $0x8] sm:$0xff]
          %v245 = vadd.f32 %v243, %v209
          %v246 = vadd.f32 %v244, %v216
          %247 = vst.msk [vmem:[#allocation2] sm:$0xff] %vm202, %v245
          %248 = vst.msk [vmem:[#allocation2 + $0x8] sm:$0xff] %vm202, %v246
          %v249 = vld [vmem:[#allocation3] sm:$0xff]
          %v250 = vld [vmem:[#allocation3 + $0x8] sm:$0xff]
          %v251 = vmax.f32 %v249, %v223
          %v252 = vmax.f32 %v250, %v230
          %253 = vst.msk [vmem:[#allocation3] sm:$0xff] %vm202, %v251
          %254 = vst.msk [vmem:[#allocation3 + $0x8] sm:$0xff] %vm202, %v252
        $region44: #{spatial_attention.1} parent=27 // pred_fallthru
          _
        // Predicated region
        $region45: #{spatial_attention.1} parent=27 // pred_check
          %p255 = pneg %p231
        $region46: #{spatial_attention.1} parent=27 // pred_check_branch
          %257 = sbr.rel (%p255) target = $region48
        $region47: #{spatial_attention.1} parent=27 // pred_region
          %258 = vst [vmem:[#allocation4] sm:$0xff] 0.0
          %259 = vst [vmem:[#allocation4 + $0x8] sm:$0xff] 0.0
          %260 = vst [vmem:[#allocation4 + $0x10] sm:$0xff] 0.0
          %261 = vst [vmem:[#allocation4 + $0x18] sm:$0xff] 0.0
          %262 = vst [vmem:[#allocation4 + $0x20] sm:$0xff] 0.0
          %263 = vst [vmem:[#allocation4 + $0x28] sm:$0xff] 0.0
          %v264 = vld [vmem:[#allocation2] sm:$0xff]
          %v265 = vld [vmem:[#allocation2 + $0x8] sm:$0xff]
          %266 = vst.msk [vmem:[#allocation4] sm:$0xff] %vm202, %v264
          %267 = vst.msk [vmem:[#allocation4 + $0x8] sm:$0xff] %vm202, %v265
          %v268 = vld [vmem:[#allocation3] sm:$0xff]
          %v269 = vld [vmem:[#allocation3 + $0x8] sm:$0xff]
          %s270 = scalar_lea.vmem [#allocation4], 24
          %271 = vst.msk [vmem:[%s270] sm:$0xff] %vm202, %v268
          %272 = vst.msk [vmem:[%s270 + $0x8] sm:$0xff] %vm202, %v269
          %v273 = vld [vmem:[#allocation4] sm:$0xff]
          %v274 = vld [vmem:[#allocation4 + $0x8] sm:$0xff]
          %v275 = vld [vmem:[#allocation4 + $0x10] sm:$0xff]
          %v276 = vld [vmem:[#allocation4 + $0x18] sm:$0xff]
          %v277 = vld [vmem:[#allocation4 + $0x20] sm:$0xff]
          %v278 = vld [vmem:[#allocation4 + $0x28] sm:$0xff]
          %v279 = vrot.slane %v273, 5
          %v280 = vrot.slane %v276, 5
          %v281 = vrot.slane %v274, 5
          %v282 = vrot.slane %v277, 5
          %v283 = vrot.slane %v275, 5
          %v284 = vrot.slane %v278, 5
          %v285 = vlaneseq
          %v286 = vshrl.u32 %v285, 7
          %vm287 = vcmp.lt.s32.totalorder %v286, 3
          %v288 = vsel %vm287, %v279, %v281
          %v289 = vsel %vm287, %v280, %v282
          %v290 = vsel %vm287, %v283, %v279
          %v291 = vsel %vm287, %v284, %v280
          %292 = vrot.lane.b32.xlu0 %v290, 3
          %v293 = vpop.permute.xlu0 %292
          %294 = vrot.lane.b32.xlu0 %v288, 3
          %v295 = vpop.permute.xlu0 %294
          %296 = vrot.lane.b32.xlu0 %v291, 3
          %v297 = vpop.permute.xlu0 %296
          %298 = vrot.lane.b32.xlu0 %v289, 3
          %v299 = vpop.permute.xlu0 %298
          %s300 = sld [smem:[#allocation9]]
          %s301 = sld [smem:[#allocation9 + $0x31]]
          %v302 = vstv %s300
          %v303 = vmul.f32 %v302, %v293
          %v304 = vmul.f32 %v302, %v295
          %v305 = vadd.f32 %v303, 0.0
          %v306 = vadd.f32 %v304, 0.0
          %v307 = vstv %s301
          %v308 = vmul.f32 %v307, %v297
          %v309 = vmul.f32 %v307, %v299
          %v310 = vadd.f32 %v305, %v308
          %v311 = vadd.f32 %v306, %v309
          %312 = vrot.lane.b32.xlu0 %v290, 2
          %v313 = vpop.permute.xlu0 %312
          %314 = vrot.lane.b32.xlu0 %v288, 2
          %v315 = vpop.permute.xlu0 %314
          %316 = vrot.lane.b32.xlu0 %v291, 2
          %v317 = vpop.permute.xlu0 %316
          %318 = vrot.lane.b32.xlu0 %v289, 2
          %v319 = vpop.permute.xlu0 %318
          %s320 = sld [smem:[#allocation9 + $0x1]]
          %s321 = sld [smem:[#allocation9 + $0x32]]
          %v322 = vstv %s320
          %v323 = vmul.f32 %v322, %v313
          %v324 = vmul.f32 %v322, %v315
          %v325 = vadd.f32 %v310, %v323
          %v326 = vadd.f32 %v311, %v324
          %v327 = vstv %s321
          %v328 = vmul.f32 %v327, %v317
          %v329 = vmul.f32 %v327, %v319
          %v330 = vadd.f32 %v325, %v328
          %v331 = vadd.f32 %v326, %v329
          %332 = vrot.lane.b32.xlu0 %v290, 1
          %v333 = vpop.permute.xlu0 %332
          %334 = vrot.lane.b32.xlu0 %v288, 1
          %v335 = vpop.permute.xlu0 %334
          %336 = vrot.lane.b32.xlu0 %v291, 1
          %v337 = vpop.permute.xlu0 %336
          %338 = vrot.lane.b32.xlu0 %v289, 1
          %v339 = vpop.permute.xlu0 %338
          %s340 = sld [smem:[#allocation9 + $0x2]]
          %s341 = sld [smem:[#allocation9 + $0x33]]
          %v342 = vstv %s340
          %v343 = vmul.f32 %v342, %v333
          %v344 = vmul.f32 %v342, %v335
          %v345 = vadd.f32 %v330, %v343
          %v346 = vadd.f32 %v331, %v344
          %v347 = vstv %s341
          %v348 = vmul.f32 %v347, %v337
          %v349 = vmul.f32 %v347, %v339
          %v350 = vadd.f32 %v345, %v348
          %v351 = vadd.f32 %v346, %v349
          %s352 = sld [smem:[#allocation9 + $0x3]]
          %s353 = sld [smem:[#allocation9 + $0x34]]
          %v354 = vstv %s352
          %v355 = vmul.f32 %v354, %v290
          %v356 = vmul.f32 %v354, %v288
          %v357 = vadd.f32 %v350, %v355
          %v358 = vadd.f32 %v351, %v356
          %v359 = vstv %s353
          %v360 = vmul.f32 %v359, %v291
          %v361 = vmul.f32 %v359, %v289
          %v362 = vadd.f32 %v357, %v360
          %v363 = vadd.f32 %v358, %v361
          %364 = vrot.lane.b32.xlu0 %v290, 127
          %v365 = vpop.permute.xlu0 %364
          %366 = vrot.lane.b32.xlu0 %v288, 127
          %v367 = vpop.permute.xlu0 %366
          %368 = vrot.lane.b32.xlu0 %v291, 127
          %v369 = vpop.permute.xlu0 %368
          %370 = vrot.lane.b32.xlu0 %v289, 127
          %v371 = vpop.permute.xlu0 %370
          %s372 = sld [smem:[#allocation9 + $0x4]]
          %s373 = sld [smem:[#allocation9 + $0x35]]
          %v374 = vstv %s372
          %v375 = vmul.f32 %v374, %v365
          %v376 = vmul.f32 %v374, %v367
          %v377 = vadd.f32 %v362, %v375
          %v378 = vadd.f32 %v363, %v376
          %v379 = vstv %s373
          %v380 = vmul.f32 %v379, %v369
          %v381 = vmul.f32 %v379, %v371
          %v382 = vadd.f32 %v377, %v380
          %v383 = vadd.f32 %v378, %v381
          %384 = vrot.lane.b32.xlu0 %v290, 126
          %v385 = vpop.permute.xlu0 %384
          %386 = vrot.lane.b32.xlu0 %v288, 126
          %v387 = vpop.permute.xlu0 %386
          %388 = vrot.lane.b32.xlu0 %v291, 126
          %v389 = vpop.permute.xlu0 %388
          %390 = vrot.lane.b32.xlu0 %v289, 126
          %v391 = vpop.permute.xlu0 %390
          %s392 = sld [smem:[#allocation9 + $0x5]]
          %s393 = sld [smem:[#allocation9 + $0x36]]
          %v394 = vstv %s392
          %v395 = vmul.f32 %v394, %v385
          %v396 = vmul.f32 %v394, %v387
          %v397 = vadd.f32 %v382, %v395
          %v398 = vadd.f32 %v383, %v396
          %v399 = vstv %s393
          %v400 = vmul.f32 %v399, %v389
          %v401 = vmul.f32 %v399, %v391
          %v402 = vadd.f32 %v397, %v400
          %v403 = vadd.f32 %v398, %v401
          %404 = vrot.lane.b32.xlu0 %v290, 125
          %v405 = vpop.permute.xlu0 %404
          %406 = vrot.lane.b32.xlu0 %v288, 125
          %v407 = vpop.permute.xlu0 %406
          %408 = vrot.lane.b32.xlu0 %v291, 125
          %v409 = vpop.permute.xlu0 %408
          %410 = vrot.lane.b32.xlu0 %v289, 125
          %v411 = vpop.permute.xlu0 %410
          %s412 = sld [smem:[#allocation9 + $0x6]]
          %s413 = sld [smem:[#allocation9 + $0x37]]
          %v414 = vstv %s412
          %v415 = vmul.f32 %v414, %v405
          %v416 = vmul.f32 %v414, %v407
          %v417 = vadd.f32 %v402, %v415
          %v418 = vadd.f32 %v403, %v416
          %v419 = vstv %s413
          %v420 = vmul.f32 %v419, %v409
          %v421 = vmul.f32 %v419, %v411
          %v422 = vadd.f32 %v417, %v420
          %v423 = vadd.f32 %v418, %v421
          %v424 = vrot.slane %v273, 6
          %v425 = vrot.slane %v276, 6
          %v426 = vrot.slane %v274, 6
          %v427 = vrot.slane %v277, 6
          %v428 = vrot.slane %v275, 6
          %v429 = vrot.slane %v278, 6
          %vm430 = vcmp.lt.s32.totalorder %v286, 2
          %v431 = vsel %vm430, %v424, %v426
          %v432 = vsel %vm430, %v425, %v427
          %v433 = vsel %vm430, %v428, %v424
          %v434 = vsel %vm430, %v429, %v425
          %435 = vrot.lane.b32.xlu0 %v433, 3
          %v436 = vpop.permute.xlu0 %435
          %437 = vrot.lane.b32.xlu0 %v431, 3
          %v438 = vpop.permute.xlu0 %437
          %439 = vrot.lane.b32.xlu0 %v434, 3
          %v440 = vpop.permute.xlu0 %439
          %441 = vrot.lane.b32.xlu0 %v432, 3
          %v442 = vpop.permute.xlu0 %441
          %s443 = sld [smem:[#allocation9 + $0x7]]
          %s444 = sld [smem:[#allocation9 + $0x38]]
          %v445 = vstv %s443
          %v446 = vmul.f32 %v445, %v436
          %v447 = vmul.f32 %v445, %v438
          %v448 = vadd.f32 %v422, %v446
          %v449 = vadd.f32 %v423, %v447
          %v450 = vstv %s444
          %v451 = vmul.f32 %v450, %v440
          %v452 = vmul.f32 %v450, %v442
          %v453 = vadd.f32 %v448, %v451
          %v454 = vadd.f32 %v449, %v452
          %455 = vrot.lane.b32.xlu0 %v433, 2
          %v456 = vpop.permute.xlu0 %455
          %457 = vrot.lane.b32.xlu0 %v431, 2
          %v458 = vpop.permute.xlu0 %457
          %459 = vrot.lane.b32.xlu0 %v434, 2
          %v460 = vpop.permute.xlu0 %459
          %461 = vrot.lane.b32.xlu0 %v432, 2
          %v462 = vpop.permute.xlu0 %461
          %s463 = sld [smem:[#allocation9 + $0x8]]
          %s464 = sld [smem:[#allocation9 + $0x39]]
          %v465 = vstv %s463
          %v466 = vmul.f32 %v465, %v456
          %v467 = vmul.f32 %v465, %v458
          %v468 = vadd.f32 %v453, %v466
          %v469 = vadd.f32 %v454, %v467
          %v470 = vstv %s464
          %v471 = vmul.f32 %v470, %v460
          %v472 = vmul.f32 %v470, %v462
          %v473 = vadd.f32 %v468, %v471
          %v474 = vadd.f32 %v469, %v472
          %475 = vrot.lane.b32.xlu0 %v433, 1
          %v476 = vpop.permute.xlu0 %475
          %477 = vrot.lane.b32.xlu0 %v431, 1
          %v478 = vpop.permute.xlu0 %477
          %479 = vrot.lane.b32.xlu0 %v434, 1
          %v480 = vpop.permute.xlu0 %479
          %481 = vrot.lane.b32.xlu0 %v432, 1
          %v482 = vpop.permute.xlu0 %481
          %s483 = sld [smem:[#allocation9 + $0x9]]
          %s484 = sld [smem:[#allocation9 + $0x3a]]
          %v485 = vstv %s483
          %v486 = vmul.f32 %v485, %v476
          %v487 = vmul.f32 %v485, %v478
          %v488 = vadd.f32 %v473, %v486
          %v489 = vadd.f32 %v474, %v487
          %v490 = vstv %s484
          %v491 = vmul.f32 %v490, %v480
          %v492 = vmul.f32 %v490, %v482
          %v493 = vadd.f32 %v488, %v491
          %v494 = vadd.f32 %v489, %v492
          %s495 = sld [smem:[#allocation9 + $0xa]]
          %s496 = sld [smem:[#allocation9 + $0x3b]]
          %v497 = vstv %s495
          %v498 = vmul.f32 %v497, %v433
          %v499 = vmul.f32 %v497, %v431
          %v500 = vadd.f32 %v493, %v498
          %v501 = vadd.f32 %v494, %v499
          %v502 = vstv %s496
          %v503 = vmul.f32 %v502, %v434
          %v504 = vmul.f32 %v502, %v432
          %v505 = vadd.f32 %v500, %v503
          %v506 = vadd.f32 %v501, %v504
          %507 = vrot.lane.b32.xlu0 %v433, 127
          %v508 = vpop.permute.xlu0 %507
          %509 = vrot.lane.b32.xlu0 %v431, 127
          %v510 = vpop.permute.xlu0 %509
          %511 = vrot.lane.b32.xlu0 %v434, 127
          %v512 = vpop.permute.xlu0 %511
          %513 = vrot.lane.b32.xlu0 %v432, 127
          %v514 = vpop.permute.xlu0 %513
          %s515 = sld [smem:[#allocation9 + $0xb]]
          %s516 = sld [smem:[#allocation9 + $0x3c]]
          %v517 = vstv %s515
          %v518 = vmul.f32 %v517, %v508
          %v519 = vmul.f32 %v517, %v510
          %v520 = vadd.f32 %v505, %v518
          %v521 = vadd.f32 %v506, %v519
          %v522 = vstv %s516
          %v523 = vmul.f32 %v522, %v512
          %v524 = vmul.f32 %v522, %v514
          %v525 = vadd.f32 %v520, %v523
          %v526 = vadd.f32 %v521, %v524
          %527 = vrot.lane.b32.xlu0 %v433, 126
          %v528 = vpop.permute.xlu0 %527
          %529 = vrot.lane.b32.xlu0 %v431, 126
          %v530 = vpop.permute.xlu0 %529
          %531 = vrot.lane.b32.xlu0 %v434, 126
          %v532 = vpop.permute.xlu0 %531
          %533 = vrot.lane.b32.xlu0 %v432, 126
          %v534 = vpop.permute.xlu0 %533
          %s535 = sld [smem:[#allocation9 + $0xc]]
          %s536 = sld [smem:[#allocation9 + $0x3d]]
          %v537 = vstv %s535
          %v538 = vmul.f32 %v537, %v528
          %v539 = vmul.f32 %v537, %v530
          %v540 = vadd.f32 %v525, %v538
          %v541 = vadd.f32 %v526, %v539
          %v542 = vstv %s536
          %v543 = vmul.f32 %v542, %v532
          %v544 = vmul.f32 %v542, %v534
          %v545 = vadd.f32 %v540, %v543
          %v546 = vadd.f32 %v541, %v544
          %547 = vrot.lane.b32.xlu0 %v433, 125
          %v548 = vpop.permute.xlu0 %547
          %549 = vrot.lane.b32.xlu0 %v431, 125
          %v550 = vpop.permute.xlu0 %549
          %551 = vrot.lane.b32.xlu0 %v434, 125
          %v552 = vpop.permute.xlu0 %551
          %553 = vrot.lane.b32.xlu0 %v432, 125
          %v554 = vpop.permute.xlu0 %553
          %s555 = sld [smem:[#allocation9 + $0xd]]
          %s556 = sld [smem:[#allocation9 + $0x3e]]
          %v557 = vstv %s555
          %v558 = vmul.f32 %v557, %v548
          %v559 = vmul.f32 %v557, %v550
          %v560 = vadd.f32 %v545, %v558
          %v561 = vadd.f32 %v546, %v559
          %v562 = vstv %s556
          %v563 = vmul.f32 %v562, %v552
          %v564 = vmul.f32 %v562, %v554
          %v565 = vadd.f32 %v560, %v563
          %v566 = vadd.f32 %v561, %v564
          %v567 = vrot.slane %v273, 7
          %v568 = vrot.slane %v276, 7
          %v569 = vrot.slane %v274, 7
          %v570 = vrot.slane %v277, 7
          %v571 = vrot.slane %v275, 7
          %v572 = vrot.slane %v278, 7
          %vm573 = vcmp.lt.s32.totalorder %v286, 1
          %v574 = vsel %vm573, %v567, %v569
          %v575 = vsel %vm573, %v568, %v570
          %v576 = vsel %vm573, %v571, %v567
          %v577 = vsel %vm573, %v572, %v568
          %578 = vrot.lane.b32.xlu0 %v576, 3
          %v579 = vpop.permute.xlu0 %578
          %580 = vrot.lane.b32.xlu0 %v574, 3
          %v581 = vpop.permute.xlu0 %580
          %582 = vrot.lane.b32.xlu0 %v577, 3
          %v583 = vpop.permute.xlu0 %582
          %584 = vrot.lane.b32.xlu0 %v575, 3
          %v585 = vpop.permute.xlu0 %584
          %s586 = sld [smem:[#allocation9 + $0xe]]
          %s587 = sld [smem:[#allocation9 + $0x3f]]
          %v588 = vstv %s586
          %v589 = vmul.f32 %v588, %v579
          %v590 = vmul.f32 %v588, %v581
          %v591 = vadd.f32 %v565, %v589
          %v592 = vadd.f32 %v566, %v590
          %v593 = vstv %s587
          %v594 = vmul.f32 %v593, %v583
          %v595 = vmul.f32 %v593, %v585
          %v596 = vadd.f32 %v591, %v594
          %v597 = vadd.f32 %v592, %v595
          %598 = vrot.lane.b32.xlu0 %v576, 2
          %v599 = vpop.permute.xlu0 %598
          %600 = vrot.lane.b32.xlu0 %v574, 2
          %v601 = vpop.permute.xlu0 %600
          %602 = vrot.lane.b32.xlu0 %v577, 2
          %v603 = vpop.permute.xlu0 %602
          %604 = vrot.lane.b32.xlu0 %v575, 2
          %v605 = vpop.permute.xlu0 %604
          %s606 = sld [smem:[#allocation9 + $0xf]]
          %s607 = sld [smem:[#allocation9 + $0x40]]
          %v608 = vstv %s606
          %v609 = vmul.f32 %v608, %v599
          %v610 = vmul.f32 %v608, %v601
          %v611 = vadd.f32 %v596, %v609
          %v612 = vadd.f32 %v597, %v610
          %v613 = vstv %s607
          %v614 = vmul.f32 %v613, %v603
          %v615 = vmul.f32 %v613, %v605
          %v616 = vadd.f32 %v611, %v614
          %v617 = vadd.f32 %v612, %v615
          %618 = vrot.lane.b32.xlu0 %v576, 1
          %v619 = vpop.permute.xlu0 %618
          %620 = vrot.lane.b32.xlu0 %v574, 1
          %v621 = vpop.permute.xlu0 %620
          %622 = vrot.lane.b32.xlu0 %v577, 1
          %v623 = vpop.permute.xlu0 %622
          %624 = vrot.lane.b32.xlu0 %v575, 1
          %v625 = vpop.permute.xlu0 %624
          %s626 = sld [smem:[#allocation9 + $0x10]]
          %s627 = sld [smem:[#allocation9 + $0x41]]
          %v628 = vstv %s626
          %v629 = vmul.f32 %v628, %v619
          %v630 = vmul.f32 %v628, %v621
          %v631 = vadd.f32 %v616, %v629
          %v632 = vadd.f32 %v617, %v630
          %v633 = vstv %s627
          %v634 = vmul.f32 %v633, %v623
          %v635 = vmul.f32 %v633, %v625
          %v636 = vadd.f32 %v631, %v634
          %v637 = vadd.f32 %v632, %v635
          %s638 = sld [smem:[#allocation9 + $0x11]]
          %s639 = sld [smem:[#allocation9 + $0x42]]
          %v640 = vstv %s638
          %v641 = vmul.f32 %v640, %v576
          %v642 = vmul.f32 %v640, %v574
          %v643 = vadd.f32 %v636, %v641
          %v644 = vadd.f32 %v637, %v642
          %v645 = vstv %s639
          %v646 = vmul.f32 %v645, %v577
          %v647 = vmul.f32 %v645, %v575
          %v648 = vadd.f32 %v643, %v646
          %v649 = vadd.f32 %v644, %v647
          %650 = vrot.lane.b32.xlu0 %v576, 127
          %v651 = vpop.permute.xlu0 %650
          %652 = vrot.lane.b32.xlu0 %v574, 127
          %v653 = vpop.permute.xlu0 %652
          %654 = vrot.lane.b32.xlu0 %v577, 127
          %v655 = vpop.permute.xlu0 %654
          %656 = vrot.lane.b32.xlu0 %v575, 127
          %v657 = vpop.permute.xlu0 %656
          %s658 = sld [smem:[#allocation9 + $0x12]]
          %s659 = sld [smem:[#allocation9 + $0x43]]
          %v660 = vstv %s658
          %v661 = vmul.f32 %v660, %v651
          %v662 = vmul.f32 %v660, %v653
          %v663 = vadd.f32 %v648, %v661
          %v664 = vadd.f32 %v649, %v662
          %v665 = vstv %s659
          %v666 = vmul.f32 %v665, %v655
          %v667 = vmul.f32 %v665, %v657
          %v668 = vadd.f32 %v663, %v666
          %v669 = vadd.f32 %v664, %v667
          %670 = vrot.lane.b32.xlu0 %v576, 126
          %v671 = vpop.permute.xlu0 %670
          %672 = vrot.lane.b32.xlu0 %v574, 126
          %v673 = vpop.permute.xlu0 %672
          %674 = vrot.lane.b32.xlu0 %v577, 126
          %v675 = vpop.permute.xlu0 %674
          %676 = vrot.lane.b32.xlu0 %v575, 126
          %v677 = vpop.permute.xlu0 %676
          %s678 = sld [smem:[#allocation9 + $0x13]]
          %s679 = sld [smem:[#allocation9 + $0x44]]
          %v680 = vstv %s678
          %v681 = vmul.f32 %v680, %v671
          %v682 = vmul.f32 %v680, %v673
          %v683 = vadd.f32 %v668, %v681
          %v684 = vadd.f32 %v669, %v682
          %v685 = vstv %s679
          %v686 = vmul.f32 %v685, %v675
          %v687 = vmul.f32 %v685, %v677
          %v688 = vadd.f32 %v683, %v686
          %v689 = vadd.f32 %v684, %v687
          %690 = vrot.lane.b32.xlu0 %v576, 125
          %v691 = vpop.permute.xlu0 %690
          %692 = vrot.lane.b32.xlu0 %v574, 125
          %v693 = vpop.permute.xlu0 %692
          %694 = vrot.lane.b32.xlu0 %v577, 125
          %v695 = vpop.permute.xlu0 %694
          %696 = vrot.lane.b32.xlu0 %v575, 125
          %v697 = vpop.permute.xlu0 %696
          %s698 = sld [smem:[#allocation9 + $0x14]]
          %s699 = sld [smem:[#allocation9 + $0x45]]
          %v700 = vstv %s698
          %v701 = vmul.f32 %v700, %v691
          %v702 = vmul.f32 %v700, %v693
          %v703 = vadd.f32 %v688, %v701
          %v704 = vadd.f32 %v689, %v702
          %v705 = vstv %s699
          %v706 = vmul.f32 %v705, %v695
          %v707 = vmul.f32 %v705, %v697
          %v708 = vadd.f32 %v703, %v706
          %v709 = vadd.f32 %v704, %v707
          %710 = vrot.lane.b32.xlu0 %v273, 3
          %v711 = vpop.permute.xlu0 %710
          %712 = vrot.lane.b32.xlu0 %v274, 3
          %v713 = vpop.permute.xlu0 %712
          %714 = vrot.lane.b32.xlu0 %v276, 3
          %v715 = vpop.permute.xlu0 %714
          %716 = vrot.lane.b32.xlu0 %v277, 3
          %v717 = vpop.permute.xlu0 %716
          %s718 = sld [smem:[#allocation9 + $0x15]]
          %s719 = sld [smem:[#allocation9 + $0x46]]
          %v720 = vstv %s718
          %v721 = vmul.f32 %v720, %v711
          %v722 = vmul.f32 %v720, %v713
          %v723 = vadd.f32 %v708, %v721
          %v724 = vadd.f32 %v709, %v722
          %v725 = vstv %s719
          %v726 = vmul.f32 %v725, %v715
          %v727 = vmul.f32 %v725, %v717
          %v728 = vadd.f32 %v723, %v726
          %v729 = vadd.f32 %v724, %v727
          %730 = vrot.lane.b32.xlu0 %v273, 2
          %v731 = vpop.permute.xlu0 %730
          %732 = vrot.lane.b32.xlu0 %v274, 2
          %v733 = vpop.permute.xlu0 %732
          %734 = vrot.lane.b32.xlu0 %v276, 2
          %v735 = vpop.permute.xlu0 %734
          %736 = vrot.lane.b32.xlu0 %v277, 2
          %v737 = vpop.permute.xlu0 %736
          %s738 = sld [smem:[#allocation9 + $0x16]]
          %s739 = sld [smem:[#allocation9 + $0x47]]
          %v740 = vstv %s738
          %v741 = vmul.f32 %v740, %v731
          %v742 = vmul.f32 %v740, %v733
          %v743 = vadd.f32 %v728, %v741
          %v744 = vadd.f32 %v729, %v742
          %v745 = vstv %s739
          %v746 = vmul.f32 %v745, %v735
          %v747 = vmul.f32 %v745, %v737
          %v748 = vadd.f32 %v743, %v746
          %v749 = vadd.f32 %v744, %v747
          %750 = vrot.lane.b32.xlu0 %v273, 1
          %v751 = vpop.permute.xlu0 %750
          %752 = vrot.lane.b32.xlu0 %v274, 1
          %v753 = vpop.permute.xlu0 %752
          %754 = vrot.lane.b32.xlu0 %v276, 1
          %v755 = vpop.permute.xlu0 %754
          %756 = vrot.lane.b32.xlu0 %v277, 1
          %v757 = vpop.permute.xlu0 %756
          %s758 = sld [smem:[#allocation9 + $0x17]]
          %s759 = sld [smem:[#allocation9 + $0x48]]
          %v760 = vstv %s758
          %v761 = vmul.f32 %v760, %v751
          %v762 = vmul.f32 %v760, %v753
          %v763 = vadd.f32 %v748, %v761
          %v764 = vadd.f32 %v749, %v762
          %v765 = vstv %s759
          %v766 = vmul.f32 %v765, %v755
          %v767 = vmul.f32 %v765, %v757
          %v768 = vadd.f32 %v763, %v766
          %v769 = vadd.f32 %v764, %v767
          %s770 = sld [smem:[#allocation9 + $0x18]]
          %s771 = sld [smem:[#allocation9 + $0x49]]
          %v772 = vstv %s770
          %v773 = vmul.f32 %v772, %v273
          %v774 = vmul.f32 %v772, %v274
          %v775 = vadd.f32 %v768, %v773
          %v776 = vadd.f32 %v769, %v774
          %v777 = vstv %s771
          %v778 = vmul.f32 %v777, %v276
          %v779 = vmul.f32 %v777, %v277
          %v780 = vadd.f32 %v775, %v778
          %v781 = vadd.f32 %v776, %v779
          %782 = vrot.lane.b32.xlu0 %v273, 127
          %v783 = vpop.permute.xlu0 %782
          %784 = vrot.lane.b32.xlu0 %v274, 127
          %v785 = vpop.permute.xlu0 %784
          %786 = vrot.lane.b32.xlu0 %v276, 127
          %v787 = vpop.permute.xlu0 %786
          %788 = vrot.lane.b32.xlu0 %v277, 127
          %v789 = vpop.permute.xlu0 %788
          %s790 = sld [smem:[#allocation9 + $0x19]]
          %s791 = sld [smem:[#allocation9 + $0x4a]]
          %v792 = vstv %s790
          %v793 = vmul.f32 %v792, %v783
          %v794 = vmul.f32 %v792, %v785
          %v795 = vadd.f32 %v780, %v793
          %v796 = vadd.f32 %v781, %v794
          %v797 = vstv %s791
          %v798 = vmul.f32 %v797, %v787
          %v799 = vmul.f32 %v797, %v789
          %v800 = vadd.f32 %v795, %v798
          %v801 = vadd.f32 %v796, %v799
          %802 = vrot.lane.b32.xlu0 %v273, 126
          %v803 = vpop.permute.xlu0 %802
          %804 = vrot.lane.b32.xlu0 %v274, 126
          %v805 = vpop.permute.xlu0 %804
          %806 = vrot.lane.b32.xlu0 %v276, 126
          %v807 = vpop.permute.xlu0 %806
          %808 = vrot.lane.b32.xlu0 %v277, 126
          %v809 = vpop.permute.xlu0 %808
          %s810 = sld [smem:[#allocation9 + $0x1a]]
          %s811 = sld [smem:[#allocation9 + $0x4b]]
          %v812 = vstv %s810
          %v813 = vmul.f32 %v812, %v803
          %v814 = vmul.f32 %v812, %v805
          %v815 = vadd.f32 %v800, %v813
          %v816 = vadd.f32 %v801, %v814
          %v817 = vstv %s811
          %v818 = vmul.f32 %v817, %v807
          %v819 = vmul.f32 %v817, %v809
          %v820 = vadd.f32 %v815, %v818
          %v821 = vadd.f32 %v816, %v819
          %822 = vrot.lane.b32.xlu0 %v273, 125
          %v823 = vpop.permute.xlu0 %822
          %824 = vrot.lane.b32.xlu0 %v274, 125
          %v825 = vpop.permute.xlu0 %824
          %826 = vrot.lane.b32.xlu0 %v276, 125
          %v827 = vpop.permute.xlu0 %826
          %828 = vrot.lane.b32.xlu0 %v277, 125
          %v829 = vpop.permute.xlu0 %828
          %s830 = sld [smem:[#allocation9 + $0x1b]]
          %s831 = sld [smem:[#allocation9 + $0x4c]]
          %v832 = vstv %s830
          %v833 = vmul.f32 %v832, %v823
          %v834 = vmul.f32 %v832, %v825
          %v835 = vadd.f32 %v820, %v833
          %v836 = vadd.f32 %v821, %v834
          %v837 = vstv %s831
          %v838 = vmul.f32 %v837, %v827
          %v839 = vmul.f32 %v837, %v829
          %v840 = vadd.f32 %v835, %v838
          %v841 = vadd.f32 %v836, %v839
          %v842 = vrot.slane %v273, 1
          %v843 = vrot.slane %v276, 1
          %v844 = vrot.slane %v274, 1
          %v845 = vrot.slane %v277, 1
          %v846 = vrot.slane %v275, 1
          %v847 = vrot.slane %v278, 1
          %vm848 = vcmp.lt.s32.totalorder %v286, 7
          %v849 = vsel %vm848, %v844, %v846
          %v850 = vsel %vm848, %v845, %v847
          %v851 = vsel %vm848, %v842, %v844
          %v852 = vsel %vm848, %v843, %v845
          %853 = vrot.lane.b32.xlu0 %v851, 3
          %v854 = vpop.permute.xlu0 %853
          %855 = vrot.lane.b32.xlu0 %v849, 3
          %v856 = vpop.permute.xlu0 %855
          %857 = vrot.lane.b32.xlu0 %v852, 3
          %v858 = vpop.permute.xlu0 %857
          %859 = vrot.lane.b32.xlu0 %v850, 3
          %v860 = vpop.permute.xlu0 %859
          %s861 = sld [smem:[#allocation9 + $0x1c]]
          %s862 = sld [smem:[#allocation9 + $0x4d]]
          %v863 = vstv %s861
          %v864 = vmul.f32 %v863, %v854
          %v865 = vmul.f32 %v863, %v856
          %v866 = vadd.f32 %v840, %v864
          %v867 = vadd.f32 %v841, %v865
          %v868 = vstv %s862
          %v869 = vmul.f32 %v868, %v858
          %v870 = vmul.f32 %v868, %v860
          %v871 = vadd.f32 %v866, %v869
          %v872 = vadd.f32 %v867, %v870
          %873 = vrot.lane.b32.xlu0 %v851, 2
          %v874 = vpop.permute.xlu0 %873
          %875 = vrot.lane.b32.xlu0 %v849, 2
          %v876 = vpop.permute.xlu0 %875
          %877 = vrot.lane.b32.xlu0 %v852, 2
          %v878 = vpop.permute.xlu0 %877
          %879 = vrot.lane.b32.xlu0 %v850, 2
          %v880 = vpop.permute.xlu0 %879
          %s881 = sld [smem:[#allocation9 + $0x1d]]
          %s882 = sld [smem:[#allocation9 + $0x4e]]
          %v883 = vstv %s881
          %v884 = vmul.f32 %v883, %v874
          %v885 = vmul.f32 %v883, %v876
          %v886 = vadd.f32 %v871, %v884
          %v887 = vadd.f32 %v872, %v885
          %v888 = vstv %s882
          %v889 = vmul.f32 %v888, %v878
          %v890 = vmul.f32 %v888, %v880
          %v891 = vadd.f32 %v886, %v889
          %v892 = vadd.f32 %v887, %v890
          %893 = vrot.lane.b32.xlu0 %v851, 1
          %v894 = vpop.permute.xlu0 %893
          %895 = vrot.lane.b32.xlu0 %v849, 1
          %v896 = vpop.permute.xlu0 %895
          %897 = vrot.lane.b32.xlu0 %v852, 1
          %v898 = vpop.permute.xlu0 %897
          %899 = vrot.lane.b32.xlu0 %v850, 1
          %v900 = vpop.permute.xlu0 %899
          %s901 = sld [smem:[#allocation9 + $0x1e]]
          %s902 = sld [smem:[#allocation9 + $0x4f]]
          %v903 = vstv %s901
          %v904 = vmul.f32 %v903, %v894
          %v905 = vmul.f32 %v903, %v896
          %v906 = vadd.f32 %v891, %v904
          %v907 = vadd.f32 %v892, %v905
          %v908 = vstv %s902
          %v909 = vmul.f32 %v908, %v898
          %v910 = vmul.f32 %v908, %v900
          %v911 = vadd.f32 %v906, %v909
          %v912 = vadd.f32 %v907, %v910
          %s913 = sld [smem:[#allocation9 + $0x1f]]
          %s914 = sld [smem:[#allocation9 + $0x50]]
          %v915 = vstv %s913
          %v916 = vmul.f32 %v915, %v851
          %v917 = vmul.f32 %v915, %v849
          %v918 = vadd.f32 %v911, %v916
          %v919 = vadd.f32 %v912, %v917
          %v920 = vstv %s914
          %v921 = vmul.f32 %v920, %v852
          %v922 = vmul.f32 %v920, %v850
          %v923 = vadd.f32 %v918, %v921
          %v924 = vadd.f32 %v919, %v922
          %925 = vrot.lane.b32.xlu0 %v851, 127
          %v926 = vpop.permute.xlu0 %925
          %927 = vrot.lane.b32.xlu0 %v849, 127
          %v928 = vpop.permute.xlu0 %927
          %929 = vrot.lane.b32.xlu0 %v852, 127
          %v930 = vpop.permute.xlu0 %929
          %931 = vrot.lane.b32.xlu0 %v850, 127
          %v932 = vpop.permute.xlu0 %931
          %s933 = sld [smem:[#allocation9 + $0x20]]
          %s934 = sld [smem:[#allocation9 + $0x51]]
          %v935 = vstv %s933
          %v936 = vmul.f32 %v935, %v926
          %v937 = vmul.f32 %v935, %v928
          %v938 = vadd.f32 %v923, %v936
          %v939 = vadd.f32 %v924, %v937
          %v940 = vstv %s934
          %v941 = vmul.f32 %v940, %v930
          %v942 = vmul.f32 %v940, %v932
          %v943 = vadd.f32 %v938, %v941
          %v944 = vadd.f32 %v939, %v942
          %945 = vrot.lane.b32.xlu0 %v851, 126
          %v946 = vpop.permute.xlu0 %945
          %947 = vrot.lane.b32.xlu0 %v849, 126
          %v948 = vpop.permute.xlu0 %947
          %949 = vrot.lane.b32.xlu0 %v852, 126
          %v950 = vpop.permute.xlu0 %949
          %951 = vrot.lane.b32.xlu0 %v850, 126
          %v952 = vpop.permute.xlu0 %951
          %s953 = sld [smem:[#allocation9 + $0x21]]
          %s954 = sld [smem:[#allocation9 + $0x52]]
          %v955 = vstv %s953
          %v956 = vmul.f32 %v955, %v946
          %v957 = vmul.f32 %v955, %v948
          %v958 = vadd.f32 %v943, %v956
          %v959 = vadd.f32 %v944, %v957
          %v960 = vstv %s954
          %v961 = vmul.f32 %v960, %v950
          %v962 = vmul.f32 %v960, %v952
          %v963 = vadd.f32 %v958, %v961
          %v964 = vadd.f32 %v959, %v962
          %965 = vrot.lane.b32.xlu0 %v851, 125
          %v966 = vpop.permute.xlu0 %965
          %967 = vrot.lane.b32.xlu0 %v849, 125
          %v968 = vpop.permute.xlu0 %967
          %969 = vrot.lane.b32.xlu0 %v852, 125
          %v970 = vpop.permute.xlu0 %969
          %971 = vrot.lane.b32.xlu0 %v850, 125
          %v972 = vpop.permute.xlu0 %971
          %s973 = sld [smem:[#allocation9 + $0x22]]
          %s974 = sld [smem:[#allocation9 + $0x53]]
          %v975 = vstv %s973
          %v976 = vmul.f32 %v975, %v966
          %v977 = vmul.f32 %v975, %v968
          %v978 = vadd.f32 %v963, %v976
          %v979 = vadd.f32 %v964, %v977
          %v980 = vstv %s974
          %v981 = vmul.f32 %v980, %v970
          %v982 = vmul.f32 %v980, %v972
          %v983 = vadd.f32 %v978, %v981
          %v984 = vadd.f32 %v979, %v982
          %v985 = vrot.slane %v273, 2
          %v986 = vrot.slane %v276, 2
          %v987 = vrot.slane %v274, 2
          %v988 = vrot.slane %v277, 2
          %v989 = vrot.slane %v275, 2
          %v990 = vrot.slane %v278, 2
          %vm991 = vcmp.lt.s32.totalorder %v286, 6
          %v992 = vsel %vm991, %v987, %v989
          %v993 = vsel %vm991, %v988, %v990
          %v994 = vsel %vm991, %v985, %v987
          %v995 = vsel %vm991, %v986, %v988
          %996 = vrot.lane.b32.xlu0 %v994, 3
          %v997 = vpop.permute.xlu0 %996
          %998 = vrot.lane.b32.xlu0 %v992, 3
          %v999 = vpop.permute.xlu0 %998
          %1000 = vrot.lane.b32.xlu0 %v995, 3
          %v1001 = vpop.permute.xlu0 %1000
          %1002 = vrot.lane.b32.xlu0 %v993, 3
          %v1003 = vpop.permute.xlu0 %1002
          %s1004 = sld [smem:[#allocation9 + $0x23]]
          %s1005 = sld [smem:[#allocation9 + $0x54]]
          %v1006 = vstv %s1004
          %v1007 = vmul.f32 %v1006, %v997
          %v1008 = vmul.f32 %v1006, %v999
          %v1009 = vadd.f32 %v983, %v1007
          %v1010 = vadd.f32 %v984, %v1008
          %v1011 = vstv %s1005
          %v1012 = vmul.f32 %v1011, %v1001
          %v1013 = vmul.f32 %v1011, %v1003
          %v1014 = vadd.f32 %v1009, %v1012
          %v1015 = vadd.f32 %v1010, %v1013
          %1016 = vrot.lane.b32.xlu0 %v994, 2
          %v1017 = vpop.permute.xlu0 %1016
          %1018 = vrot.lane.b32.xlu0 %v992, 2
          %v1019 = vpop.permute.xlu0 %1018
          %1020 = vrot.lane.b32.xlu0 %v995, 2
          %v1021 = vpop.permute.xlu0 %1020
          %1022 = vrot.lane.b32.xlu0 %v993, 2
          %v1023 = vpop.permute.xlu0 %1022
          %s1024 = sld [smem:[#allocation9 + $0x24]]
          %s1025 = sld [smem:[#allocation9 + $0x55]]
          %v1026 = vstv %s1024
          %v1027 = vmul.f32 %v1026, %v1017
          %v1028 = vmul.f32 %v1026, %v1019
          %v1029 = vadd.f32 %v1014, %v1027
          %v1030 = vadd.f32 %v1015, %v1028
          %v1031 = vstv %s1025
          %v1032 = vmul.f32 %v1031, %v1021
          %v1033 = vmul.f32 %v1031, %v1023
          %v1034 = vadd.f32 %v1029, %v1032
          %v1035 = vadd.f32 %v1030, %v1033
          %1036 = vrot.lane.b32.xlu0 %v994, 1
          %v1037 = vpop.permute.xlu0 %1036
          %1038 = vrot.lane.b32.xlu0 %v992, 1
          %v1039 = vpop.permute.xlu0 %1038
          %1040 = vrot.lane.b32.xlu0 %v995, 1
          %v1041 = vpop.permute.xlu0 %1040
          %1042 = vrot.lane.b32.xlu0 %v993, 1
          %v1043 = vpop.permute.xlu0 %1042
          %s1044 = sld [smem:[#allocation9 + $0x25]]
          %s1045 = sld [smem:[#allocation9 + $0x56]]
          %v1046 = vstv %s1044
          %v1047 = vmul.f32 %v1046, %v1037
          %v1048 = vmul.f32 %v1046, %v1039
          %v1049 = vadd.f32 %v1034, %v1047
          %v1050 = vadd.f32 %v1035, %v1048
          %v1051 = vstv %s1045
          %v1052 = vmul.f32 %v1051, %v1041
          %v1053 = vmul.f32 %v1051, %v1043
          %v1054 = vadd.f32 %v1049, %v1052
          %v1055 = vadd.f32 %v1050, %v1053
          %s1056 = sld [smem:[#allocation9 + $0x26]]
          %s1057 = sld [smem:[#allocation9 + $0x57]]
          %v1058 = vstv %s1056
          %v1059 = vmul.f32 %v1058, %v994
          %v1060 = vmul.f32 %v1058, %v992
          %v1061 = vadd.f32 %v1054, %v1059
          %v1062 = vadd.f32 %v1055, %v1060
          %v1063 = vstv %s1057
          %v1064 = vmul.f32 %v1063, %v995
          %v1065 = vmul.f32 %v1063, %v993
          %v1066 = vadd.f32 %v1061, %v1064
          %v1067 = vadd.f32 %v1062, %v1065
          %1068 = vrot.lane.b32.xlu0 %v994, 127
          %v1069 = vpop.permute.xlu0 %1068
          %1070 = vrot.lane.b32.xlu0 %v992, 127
          %v1071 = vpop.permute.xlu0 %1070
          %1072 = vrot.lane.b32.xlu0 %v995, 127
          %v1073 = vpop.permute.xlu0 %1072
          %1074 = vrot.lane.b32.xlu0 %v993, 127
          %v1075 = vpop.permute.xlu0 %1074
          %s1076 = sld [smem:[#allocation9 + $0x27]]
          %s1077 = sld [smem:[#allocation9 + $0x58]]
          %v1078 = vstv %s1076
          %v1079 = vmul.f32 %v1078, %v1069
          %v1080 = vmul.f32 %v1078, %v1071
          %v1081 = vadd.f32 %v1066, %v1079
          %v1082 = vadd.f32 %v1067, %v1080
          %v1083 = vstv %s1077
          %v1084 = vmul.f32 %v1083, %v1073
          %v1085 = vmul.f32 %v1083, %v1075
          %v1086 = vadd.f32 %v1081, %v1084
          %v1087 = vadd.f32 %v1082, %v1085
          %1088 = vrot.lane.b32.xlu0 %v994, 126
          %v1089 = vpop.permute.xlu0 %1088
          %1090 = vrot.lane.b32.xlu0 %v992, 126
          %v1091 = vpop.permute.xlu0 %1090
          %1092 = vrot.lane.b32.xlu0 %v995, 126
          %v1093 = vpop.permute.xlu0 %1092
          %1094 = vrot.lane.b32.xlu0 %v993, 126
          %v1095 = vpop.permute.xlu0 %1094
          %s1096 = sld [smem:[#allocation9 + $0x28]]
          %s1097 = sld [smem:[#allocation9 + $0x59]]
          %v1098 = vstv %s1096
          %v1099 = vmul.f32 %v1098, %v1089
          %v1100 = vmul.f32 %v1098, %v1091
          %v1101 = vadd.f32 %v1086, %v1099
          %v1102 = vadd.f32 %v1087, %v1100
          %v1103 = vstv %s1097
          %v1104 = vmul.f32 %v1103, %v1093
          %v1105 = vmul.f32 %v1103, %v1095
          %v1106 = vadd.f32 %v1101, %v1104
          %v1107 = vadd.f32 %v1102, %v1105
          %1108 = vrot.lane.b32.xlu0 %v994, 125
          %v1109 = vpop.permute.xlu0 %1108
          %1110 = vrot.lane.b32.xlu0 %v992, 125
          %v1111 = vpop.permute.xlu0 %1110
          %1112 = vrot.lane.b32.xlu0 %v995, 125
          %v1113 = vpop.permute.xlu0 %1112
          %1114 = vrot.lane.b32.xlu0 %v993, 125
          %v1115 = vpop.permute.xlu0 %1114
          %s1116 = sld [smem:[#allocation9 + $0x29]]
          %s1117 = sld [smem:[#allocation9 + $0x5a]]
          %v1118 = vstv %s1116
          %v1119 = vmul.f32 %v1118, %v1109
          %v1120 = vmul.f32 %v1118, %v1111
          %v1121 = vadd.f32 %v1106, %v1119
          %v1122 = vadd.f32 %v1107, %v1120
          %v1123 = vstv %s1117
          %v1124 = vmul.f32 %v1123, %v1113
          %v1125 = vmul.f32 %v1123, %v1115
          %v1126 = vadd.f32 %v1121, %v1124
          %v1127 = vadd.f32 %v1122, %v1125
          %v1128 = vrot.slane %v273, 3
          %v1129 = vrot.slane %v276, 3
          %v1130 = vrot.slane %v274, 3
          %v1131 = vrot.slane %v277, 3
          %v1132 = vrot.slane %v275, 3
          %v1133 = vrot.slane %v278, 3
          %vm1134 = vcmp.lt.s32.totalorder %v286, 5
          %v1135 = vsel %vm1134, %v1130, %v1132
          %v1136 = vsel %vm1134, %v1131, %v1133
          %v1137 = vsel %vm1134, %v1128, %v1130
          %v1138 = vsel %vm1134, %v1129, %v1131
          %1139 = vrot.lane.b32.xlu0 %v1137, 3
          %v1140 = vpop.permute.xlu0 %1139
          %1141 = vrot.lane.b32.xlu0 %v1135, 3
          %v1142 = vpop.permute.xlu0 %1141
          %1143 = vrot.lane.b32.xlu0 %v1138, 3
          %v1144 = vpop.permute.xlu0 %1143
          %1145 = vrot.lane.b32.xlu0 %v1136, 3
          %v1146 = vpop.permute.xlu0 %1145
          %s1147 = sld [smem:[#allocation9 + $0x2a]]
          %s1148 = sld [smem:[#allocation9 + $0x5b]]
          %v1149 = vstv %s1147
          %v1150 = vmul.f32 %v1149, %v1140
          %v1151 = vmul.f32 %v1149, %v1142
          %v1152 = vadd.f32 %v1126, %v1150
          %v1153 = vadd.f32 %v1127, %v1151
          %v1154 = vstv %s1148
          %v1155 = vmul.f32 %v1154, %v1144
          %v1156 = vmul.f32 %v1154, %v1146
          %v1157 = vadd.f32 %v1152, %v1155
          %v1158 = vadd.f32 %v1153, %v1156
          %1159 = vrot.lane.b32.xlu0 %v1137, 2
          %v1160 = vpop.permute.xlu0 %1159
          %1161 = vrot.lane.b32.xlu0 %v1135, 2
          %v1162 = vpop.permute.xlu0 %1161
          %1163 = vrot.lane.b32.xlu0 %v1138, 2
          %v1164 = vpop.permute.xlu0 %1163
          %1165 = vrot.lane.b32.xlu0 %v1136, 2
          %v1166 = vpop.permute.xlu0 %1165
          %s1167 = sld [smem:[#allocation9 + $0x2b]]
          %s1168 = sld [smem:[#allocation9 + $0x5c]]
          %v1169 = vstv %s1167
          %v1170 = vmul.f32 %v1169, %v1160
          %v1171 = vmul.f32 %v1169, %v1162
          %v1172 = vadd.f32 %v1157, %v1170
          %v1173 = vadd.f32 %v1158, %v1171
          %v1174 = vstv %s1168
          %v1175 = vmul.f32 %v1174, %v1164
          %v1176 = vmul.f32 %v1174, %v1166
          %v1177 = vadd.f32 %v1172, %v1175
          %v1178 = vadd.f32 %v1173, %v1176
          %1179 = vrot.lane.b32.xlu0 %v1137, 1
          %v1180 = vpop.permute.xlu0 %1179
          %1181 = vrot.lane.b32.xlu0 %v1135, 1
          %v1182 = vpop.permute.xlu0 %1181
          %1183 = vrot.lane.b32.xlu0 %v1138, 1
          %v1184 = vpop.permute.xlu0 %1183
          %1185 = vrot.lane.b32.xlu0 %v1136, 1
          %v1186 = vpop.permute.xlu0 %1185
          %s1187 = sld [smem:[#allocation9 + $0x2c]]
          %s1188 = sld [smem:[#allocation9 + $0x5d]]
          %v1189 = vstv %s1187
          %v1190 = vmul.f32 %v1189, %v1180
          %v1191 = vmul.f32 %v1189, %v1182
          %v1192 = vadd.f32 %v1177, %v1190
          %v1193 = vadd.f32 %v1178, %v1191
          %v1194 = vstv %s1188
          %v1195 = vmul.f32 %v1194, %v1184
          %v1196 = vmul.f32 %v1194, %v1186
          %v1197 = vadd.f32 %v1192, %v1195
          %v1198 = vadd.f32 %v1193, %v1196
          %s1199 = sld [smem:[#allocation9 + $0x2d]]
          %s1200 = sld [smem:[#allocation9 + $0x5e]]
          %v1201 = vstv %s1199
          %v1202 = vmul.f32 %v1201, %v1137
          %v1203 = vmul.f32 %v1201, %v1135
          %v1204 = vadd.f32 %v1197, %v1202
          %v1205 = vadd.f32 %v1198, %v1203
          %v1206 = vstv %s1200
          %v1207 = vmul.f32 %v1206, %v1138
          %v1208 = vmul.f32 %v1206, %v1136
          %v1209 = vadd.f32 %v1204, %v1207
          %v1210 = vadd.f32 %v1205, %v1208
          %1211 = vrot.lane.b32.xlu0 %v1137, 127
          %v1212 = vpop.permute.xlu0 %1211
          %1213 = vrot.lane.b32.xlu0 %v1135, 127
          %v1214 = vpop.permute.xlu0 %1213
          %1215 = vrot.lane.b32.xlu0 %v1138, 127
          %v1216 = vpop.permute.xlu0 %1215
          %1217 = vrot.lane.b32.xlu0 %v1136, 127
          %v1218 = vpop.permute.xlu0 %1217
          %s1219 = sld [smem:[#allocation9 + $0x2e]]
          %s1220 = sld [smem:[#allocation9 + $0x5f]]
          %v1221 = vstv %s1219
          %v1222 = vmul.f32 %v1221, %v1212
          %v1223 = vmul.f32 %v1221, %v1214
          %v1224 = vadd.f32 %v1209, %v1222
          %v1225 = vadd.f32 %v1210, %v1223
          %v1226 = vstv %s1220
          %v1227 = vmul.f32 %v1226, %v1216
          %v1228 = vmul.f32 %v1226, %v1218
          %v1229 = vadd.f32 %v1224, %v1227
          %v1230 = vadd.f32 %v1225, %v1228
          %1231 = vrot.lane.b32.xlu0 %v1137, 126
          %v1232 = vpop.permute.xlu0 %1231
          %1233 = vrot.lane.b32.xlu0 %v1135, 126
          %v1234 = vpop.permute.xlu0 %1233
          %1235 = vrot.lane.b32.xlu0 %v1138, 126
          %v1236 = vpop.permute.xlu0 %1235
          %1237 = vrot.lane.b32.xlu0 %v1136, 126
          %v1238 = vpop.permute.xlu0 %1237
          %s1239 = sld [smem:[#allocation9 + $0x2f]]
          %s1240 = sld [smem:[#allocation9 + $0x60]]
          %v1241 = vstv %s1239
          %v1242 = vmul.f32 %v1241, %v1232
          %v1243 = vmul.f32 %v1241, %v1234
          %v1244 = vadd.f32 %v1229, %v1242
          %v1245 = vadd.f32 %v1230, %v1243
          %v1246 = vstv %s1240
          %v1247 = vmul.f32 %v1246, %v1236
          %v1248 = vmul.f32 %v1246, %v1238
          %v1249 = vadd.f32 %v1244, %v1247
          %v1250 = vadd.f32 %v1245, %v1248
          %1251 = vrot.lane.b32.xlu0 %v1137, 125
          %v1252 = vpop.permute.xlu0 %1251
          %1253 = vrot.lane.b32.xlu0 %v1135, 125
          %v1254 = vpop.permute.xlu0 %1253
          %1255 = vrot.lane.b32.xlu0 %v1138, 125
          %v1256 = vpop.permute.xlu0 %1255
          %1257 = vrot.lane.b32.xlu0 %v1136, 125
          %v1258 = vpop.permute.xlu0 %1257
          %s1259 = sld [smem:[#allocation9 + $0x30]]
          %s1260 = sld [smem:[#allocation9 + $0x61]]
          %v1261 = vstv %s1259
          %v1262 = vmul.f32 %v1261, %v1252
          %v1263 = vmul.f32 %v1261, %v1254
          %v1264 = vadd.f32 %v1249, %v1262
          %v1265 = vadd.f32 %v1250, %v1263
          %v1266 = vstv %s1260
          %v1267 = vmul.f32 %v1266, %v1256
          %v1268 = vmul.f32 %v1266, %v1258
          %v1269 = vadd.f32 %v1264, %v1267
          %v1270 = vadd.f32 %v1265, %v1268
          %v1271 = vxor.u32 %v1269, 2147483648
          %v1272 = vxor.u32 %v1270, 2147483648
          %v1273 = vmul.f32 %v1271, 1.442695
          %v1274 = vpow.pop %v1273
          %v1275 = vmul.f32 %v1272, 1.442695
          %v1276 = vpow.pop %v1275
          %v1277 = vadd.f32 %v1274, 1.0
          %v1278 = vadd.f32 %v1276, 1.0
          %v1279 = vrcp.pop %v1277
          %v1280 = vmul.f32 1.0, %v1279
          %v1281 = vrcp.pop %v1278
          %v1282 = vmul.f32 1.0, %v1281
          %1283 = vst.msk [vmem:[%s192] sm:$0xff] %vm202, %v1280
          %1284 = vst.msk [vmem:[%s192 + $0x8] sm:$0xff] %vm202, %v1282
        $region48: #{spatial_attention.1} parent=27 // pred_fallthru
          _
        %s1285 = sand.u32 %s89, 1
        %s1286 = scalar_lea.sflag [#allocation7], %s1285
        %s1287 = sand.u32 %s89, 1
        %s1288 = smul.addr %s1287, 16
        %s1289 = scalar_lea.vmem [#allocation10], %s1288
        // Predicated region
        $region49: #{spatial_attention.1} parent=27 // pred_check
          %p1290 = pneg %p99
        $region50: #{spatial_attention.1} parent=27 // pred_check_branch
          %1292 = sbr.rel (%p1290) target = $region52
        $region51: #{spatial_attention.1} parent=27 // pred_region
          %s1294 = ssub.s32 256, 256
          %1295 = vsyncadd %s1286, %s1294
          %s1296 = smul.addr %s24, 2
          %s1297 = smul.addr %s1296, 128
          %s1298 = scalar_lea.hbm %s2, %s1297
          %s1299 = sshll.u32 %s1289, 4
          %s1300 = int_to_ptr.vmem [resolvable:$true] %s1299
          %1305 = dma.vmem_to_hbm [thread:$0]  %s1300, 256, %s1298, %s1286, 128, 128, 8
        $region52: #{spatial_attention.1} parent=27 // pred_fallthru
          _
      $region28: #{spatial_attention.1} parent=5 // pred_fallthru
        _
      %p1306 = scmp.le.s32.totalorder 2, %s15
      // Predicated region
      $region53: #{spatial_attention.1} parent=5 // pred_check
        %p1307 = pneg %p1306
      $region54: #{spatial_attention.1} parent=5 // pred_check_branch
        %1309 = sbr.rel (%p1307) target = $region56
      $region55: #{spatial_attention.1} parent=5 // pred_region
        %s1310 = ssub.s32 %s15, 2
        // Predicated region
        $region57: #{spatial_attention.1} parent=55 // pred_check
          %p1311 = pneg %p105
        $region58: #{spatial_attention.1} parent=55 // pred_check_branch
          %1313 = sbr.rel (%p1311) target = $region60
        $region59: #{spatial_attention.1} parent=55 // pred_region
          %s1314 = sand.u32 %s90, 1
          %s1315 = scalar_lea.sflag [#allocation7], %s1314
          %s1316 = sand.u32 %s90, 1
          %s1317 = smul.addr %s1316, 16
          %s1318 = scalar_lea.vmem [#allocation10], %s1317
          %1319 = dma.done %s1315, 256
        $region60: #{spatial_attention.1} parent=55 // pred_fallthru
          _
      $region56: #{spatial_attention.1} parent=5 // pred_fallthru
        _
    $region6: #{spatial_attention.1} parent=1 // loop_footer
      %s19 = sadd.s32 1, %s15
    $region7: #{spatial_attention.1} parent=1 // loop_footer_branch
      %14 = sbr.rel target = $region3
    $region8: #{spatial_attention.1} parent=1 // loop_exit
      _
    %1320 = vsyncpa [#allocation6], 1
    %s1321 = scalar_lea.sflag [#allocation6], 1
    %1322 = vsyncpa %s1321, 1
    %1323 = vsyncpa [#allocation7], 1
    %s1324 = scalar_lea.sflag [#allocation7], 1
    %1325 = vsyncpa %s1324, 1
    %1326 = vsyncpa [#allocation8], 1
    %s1327 = scalar_lea.sflag [#allocation8], 1
    %1328 = vsyncpa %s1327, 1

</llo_original>
